<compile_context>
chip_gen: v6e
topology: v6e:2x2x1
jax: 0.10.0
libtpu: 0.0.40
codegen_flags: <defaults>
</compile_context>

<pallas_src>
import jax
import jax.numpy as jnp
from jax import lax
from jax.experimental import pallas as pl
from jax.experimental.pallas import tpu as pltpu

_LANE = 128
_ACC_TARGET_BYTES = 256 * 1024  # target f32 accumulator footprint per strip


def _dwconv_kernel(x_ref, top_ref, bot_ref, w_ref, b_ref, o_ref, xp_ref):
    # x_ref   : (1, SH, W, CB)   row strip of the NHWC input (channels on lanes)
    # top_ref : (1, 1, W, CB)    row directly above the strip (clamped at image top)
    # bot_ref : (1, 1, W, CB)    row directly below the strip (clamped at image bottom)
    # w_ref   : (9, CB)          tap (dy*3 + dx) per channel
    # b_ref   : (1, CB)
    # o_ref   : (1, SH, W, CB)
    # xp_ref  : (SH+2, W+2, CB)  f32 scratch: zero-padded strip (halo built in VMEM)
    SH = o_ref.shape[1]
    W = o_ref.shape[2]
    CB = o_ref.shape[3]
    s = pl.program_id(2)
    ns = pl.num_programs(2)

    # ---- Build the padded strip in VMEM ------------------------------------
    # Zero only the 1-pixel halo ring; copy the interior once with a single
    # upcast (f32 scratch), so bf16 pays one convert total, not one per tap.
    zcol = jnp.zeros((SH + 2, 1, CB), jnp.float32)
    xp_ref[:, 0:1, :] = zcol
    xp_ref[:, W + 1:W + 2, :] = zcol
    xp_ref[1:SH + 1, 1:W + 1, :] = x_ref[0].astype(jnp.float32)

    zrow = jnp.zeros((1, W, CB), jnp.float32)

    @pl.when(s == 0)
    def _():
        xp_ref[0:1, 1:W + 1, :] = zrow            # image top boundary

    @pl.when(s > 0)
    def _():
        xp_ref[0:1, 1:W + 1, :] = top_ref[0].astype(jnp.float32)

    @pl.when(s == ns - 1)
    def _():
        xp_ref[SH + 1:SH + 2, 1:W + 1, :] = zrow  # image bottom boundary

    @pl.when(s < ns - 1)
    def _():
        xp_ref[SH + 1:SH + 2, 1:W + 1, :] = bot_ref[0].astype(jnp.float32)

    # ---- 3x3 depthwise multiply-accumulate (f32) ----------------------------
    w = w_ref[...].astype(jnp.float32)                         # hoisted, cast once
    acc = jnp.broadcast_to(
        b_ref[...].astype(jnp.float32).reshape(1, 1, CB), (SH, W, CB))
    for dy in range(3):
        for dx in range(3):
            acc = acc + xp_ref[dy:dy + SH, dx:dx + W, :] * w[dy * 3 + dx, :]
    o_ref[0] = acc.astype(o_ref.dtype)


def _strip_rows(H, W, cb):
    """Rows per strip: ~_ACC_TARGET_BYTES of f32 accumulator; require SH | H."""
    target = max(1, min(H, _ACC_TARGET_BYTES // (W * cb * 4)))
    best = 1
    for d in range(1, H + 1):
        if H % d == 0 and d <= target:
            best = d
    return best


def _choose_tiling(N, H, W, C_pad):
    cb = _LANE
    # Small-spatial shapes: grow the channel block (per-step overhead ~0.35us
    # dominates tiny blocks), but keep >=2 grid steps so both v7x TCs stay busy.
    while (cb < 512 and C_pad % (cb * 2) == 0
           and H * W * (cb * 2) * 4 <= 512 * 1024
           and N * (C_pad // (cb * 2)) >= 2):
        cb *= 2
    sh = _strip_rows(H, W, cb)
    # Never let the whole grid collapse to a single step (idles one v7x core).
    if N * (C_pad // cb) * (H // sh) < 2 and sh % 2 == 0:
        sh //= 2
    return cb, sh


def _vmem_limit_bytes():
    # Generation-aware: ~75% of per-core VMEM (48 MiB on v7x, ~96-100 MiB on
    # the 128 MiB v5e/v6e parts), leaving headroom for double-buffering.
    cap = 64 * 1024 * 1024
    try:
        cap = int(pltpu.get_tpu_info().vmem_capacity_bytes)
    except Exception:
        pass
    return max(32 * 1024 * 1024, min(cap * 3 // 4, 100 * 1024 * 1024))


def dwconv3x3_nhwc(x_nhwc, weight, bias, *, cb=None, sh=None):
    """Depthwise 3x3 conv, stride 1, padding 1, channels-last.

    x_nhwc : (N, H, W, C), weight: (C, 1, 3, 3), bias: (C,) -> (N, H, W, C)
    """
    N, H, W, C = x_nhwc.shape
    C_pad = -(-C // _LANE) * _LANE

    # Weight repacking: (C,1,3,3) -> (9, C), row index = dy*3 + dx.
    w_taps = jnp.transpose(weight[:, 0, :, :], (1, 2, 0)).reshape(9, C)
    b_row = bias.reshape(1, C)
    if C_pad != C:
        # Lane-dense channels: zero-pad channels (weights/bias too), slice output.
        # TODO(synk): for very small C with large W, a W-on-lanes layout would
        # avoid this padding traffic entirely.
        x_nhwc = jnp.pad(x_nhwc, ((0, 0), (0, 0), (0, 0), (0, C_pad - C)))
        w_taps = jnp.pad(w_taps, ((0, 0), (0, C_pad - C)))
        b_row = jnp.pad(b_row, ((0, 0), (0, C_pad - C)))

    auto_cb, auto_sh = _choose_tiling(N, H, W, C_pad)
    cb = auto_cb if cb is None else cb
    sh = auto_sh if sh is None else sh
    assert C_pad % cb == 0 and cb % _LANE == 0, "cb must be a 128-multiple dividing C_pad"
    assert H % sh == 0, "strip height must divide H"
    n_strips = H // sh
    grid = (N, C_pad // cb, n_strips)

    strip_spec = pl.BlockSpec((1, sh, W, cb), lambda n, c, s: (n, s, 0, c))
    # Halo rows: block size 1 along H => block index == element row index.
    top_spec = pl.BlockSpec(
        (1, 1, W, cb), lambda n, c, s: (n, jnp.maximum(s * sh - 1, 0), 0, c))
    bot_spec = pl.BlockSpec(
        (1, 1, W, cb), lambda n, c, s: (n, jnp.minimum((s + 1) * sh, H - 1), 0, c))

    out_pad = pl.pallas_call(
        _dwconv_kernel,
        out_shape=jax.ShapeDtypeStruct((N, H, W, C_pad), x_nhwc.dtype),
        grid_spec=pltpu.PrefetchScalarGridSpec(
            num_scalar_prefetch=0,
            grid=grid,
            in_specs=[
                strip_spec,
                top_spec,
                bot_spec,
                pl.BlockSpec((9, cb), lambda n, c, s: (0, c)),
                pl.BlockSpec((1, cb), lambda n, c, s: (0, c)),
            ],
            out_specs=pl.BlockSpec((1, sh, W, cb), lambda n, c, s: (n, s, 0, c)),
            scratch_shapes=[pltpu.VMEM((sh + 2, W + 2, cb), jnp.float32)],
        ),
        compiler_params=pltpu.CompilerParams(
            dimension_semantics=("parallel", "parallel", "parallel"),
            vmem_limit_bytes=_vmem_limit_bytes(),
        ),
    )(x_nhwc, x_nhwc, x_nhwc, w_taps, b_row)

    return out_pad[..., :C] if C_pad != C else out_pad


def dwconv3x3(x_nchw, weight, bias, *, cb=None, sh=None):
    """PyTorch-facing NCHW entry point (DWConv3x3.forward semantics)."""
    # TODO(synk): if the surrounding model is channels-last, call dwconv3x3_nhwc
    # directly — each transpose below is a full extra HBM read+write.
    x = jnp.transpose(x_nchw, (0, 2, 3, 1))            # NCHW -> NHWC
    out = dwconv3x3_nhwc(x, weight, bias, cb=cb, sh=sh)
    return jnp.transpose(out, (0, 3, 1, 2))            # NHWC -> NCHW


def _reference(x_nchw, weight, bias):
    """Pure-JAX reference (matches torch depthwise conv semantics), f32 accumulate."""
    C = x_nchw.shape[1]
    y = lax.conv_general_dilated(
        x_nchw.astype(jnp.float32), weight.astype(jnp.float32),
        window_strides=(1, 1), padding=((1, 1), (1, 1)),
        dimension_numbers=("NCHW", "OIHW", "NCHW"),
        feature_group_count=C)
    return y + bias.astype(jnp.float32).reshape(1, C, 1, 1)


def _run_case(key, N, C, H, W, dtype, atol, rtol, cb=None, sh=None):
    k_x, k_w, k_b = jax.random.split(key, 3)
    x = jax.random.normal(k_x, (N, C, H, W), dtype=jnp.float32)
    weight = jax.random.normal(k_w, (C, 1, 3, 3), dtype=jnp.float32) * 0.1
    bias = jax.random.normal(k_b, (C,), dtype=jnp.float32) * 0.1

    x = x.astype(dtype)
    weight = weight.astype(dtype)
    bias = bias.astype(dtype)

    out = dwconv3x3(x, weight, bias, cb=cb, sh=sh)
    out = jax.block_until_ready(out)
    assert out.shape == (N, C, H, W)
    assert out.dtype == dtype

    ref = _reference(x, weight, bias)
    assert jnp.allclose(out.astype(jnp.float32), ref, atol=atol, rtol=rtol), (
        f"mismatch vs reference for case N={N} C={C} H={H} W={W} dtype={dtype}")


if __name__ == "__main__":
    key = jax.random.PRNGKey(0)
    k0, k1, k2 = jax.random.split(key, 3)

    # Small case from the module spec (C=4 padded to 128 lanes, single strip).
    _run_case(k0, N=2, C=4, H=16, W=16, dtype=jnp.float32, atol=1e-5, rtol=1e-5)

    # Multi-strip + multi-channel-block path (forced sh=8 -> 4 strips: exercises
    # the cross-strip halo and image top/bottom boundaries).
    _run_case(k1, N=1, C=256, H=32, W=16, dtype=jnp.float32, atol=1e-5, rtol=1e-5,
              sh=8)

    # bf16 I/O with single-upcast f32 scratch + f32 accumulate, small-spatial path.
    _run_case(k2, N=1, C=256, H=8, W=8, dtype=jnp.bfloat16, atol=5e-2, rtol=5e-2)

    print("KERNEL_OK")
</pallas_src>

<mosaic_0001>
module attributes {stable_mosaic.version = 11 : i64} {
  func.func @_dwconv_kernel(%arg0: i32, %arg1: i32, %arg2: i32, %arg3: memref<1x16x16x128xf32, #tpu.memory_space<vmem>>, %arg4: memref<1x1x16x128xf32, #tpu.memory_space<vmem>>, %arg5: memref<1x1x16x128xf32, #tpu.memory_space<vmem>>, %arg6: memref<9x128xf32, #tpu.memory_space<vmem>>, %arg7: memref<1x128xf32, #tpu.memory_space<vmem>>, %arg8: memref<1x16x16x128xf32, #tpu.memory_space<vmem>>, %arg9: memref<18x18x128xf32, #tpu.memory_space<vmem>>) attributes {dimension_semantics = [#tpu.dimension_semantics<parallel>, #tpu.dimension_semantics<parallel>, #tpu.dimension_semantics<parallel>], iteration_bounds = array<i64: 2, 1, 1>, scalar_prefetch = 0 : i64, scratch_operands = 1 : i64, tpu.core_type = #tpu.core_type<tc>, window_params = [{transform_indices = @transform_0, window_bounds = array<i64: 1, 16, 16, 128>}, {transform_indices = @transform_1, window_bounds = array<i64: 1, 1, 16, 128>}, {transform_indices = @transform_2, window_bounds = array<i64: 1, 1, 16, 128>}, {transform_indices = @transform_3, window_bounds = array<i64: 9, 128>}, {transform_indices = @transform_4, window_bounds = array<i64: 1, 128>}, {transform_indices = @transform_5, window_bounds = array<i64: 1, 16, 16, 128>}]} {
    %cst = arith.constant 0.000000e+00 : f32
    %0 = vector.broadcast %cst : f32 to vector<18x1x128xf32>
    %c0 = arith.constant 0 : index
    %c0_0 = arith.constant 0 : index
    %c0_1 = arith.constant 0 : index
    %1 = vector.load %arg9[%c0, %c0_0, %c0_1] : memref<18x18x128xf32, #tpu.memory_space<vmem>>, vector<18x1x128xf32>
    tpu.vector_store %arg9[%c0, %c0_0, %c0_1], %0 {strides = array<i32>} : memref<18x18x128xf32, #tpu.memory_space<vmem>>, vector<18x1x128xf32>,
    %c0_2 = arith.constant 0 : index
    %c17 = arith.constant 17 : index
    %c0_3 = arith.constant 0 : index
    %2 = vector.load %arg9[%c0_2, %c17, %c0_3] : memref<18x18x128xf32, #tpu.memory_space<vmem>>, vector<18x1x128xf32>
    tpu.vector_store %arg9[%c0_2, %c17, %c0_3], %0 {strides = array<i32>} : memref<18x18x128xf32, #tpu.memory_space<vmem>>, vector<18x1x128xf32>,
    %c0_4 = arith.constant 0 : index
    %c0_5 = arith.constant 0 : index
    %c0_6 = arith.constant 0 : index
    %c0_7 = arith.constant 0 : index
    %3 = vector.load %arg3[%c0_4, %c0_5, %c0_6, %c0_7] : memref<1x16x16x128xf32, #tpu.memory_space<vmem>>, vector<1x16x16x128xf32>
    %4 = vector.shape_cast %3 : vector<1x16x16x128xf32> to vector<16x16x128xf32>
    %c1 = arith.constant 1 : index
    %c1_8 = arith.constant 1 : index
    %c0_9 = arith.constant 0 : index
    %5 = vector.load %arg9[%c1, %c1_8, %c0_9] : memref<18x18x128xf32, #tpu.memory_space<vmem>>, vector<16x16x128xf32>
    tpu.vector_store %arg9[%c1, %c1_8, %c0_9], %4 {strides = array<i32>} : memref<18x18x128xf32, #tpu.memory_space<vmem>>, vector<16x16x128xf32>,
    %cst_10 = arith.constant 0.000000e+00 : f32
    %6 = vector.broadcast %cst_10 : f32 to vector<1x16x128xf32>
    %c0_i32 = arith.constant 0 : i32
    %7 = arith.cmpi eq, %arg2, %c0_i32 : i32
    %8 = arith.extui %7 : i1 to i32
    %c0_i32_11 = arith.constant 0 : i32
    %9 = arith.cmpi ne, %8, %c0_i32_11 : i32
    scf.if %9 {
      %c0_52 = arith.constant 0 : index
      %c1_53 = arith.constant 1 : index
      %c0_54 = arith.constant 0 : index
      %90 = vector.load %arg9[%c0_52, %c1_53, %c0_54] : memref<18x18x128xf32, #tpu.memory_space<vmem>>, vector<1x16x128xf32>
      tpu.vector_store %arg9[%c0_52, %c1_53, %c0_54], %6 {strides = array<i32>} : memref<18x18x128xf32, #tpu.memory_space<vmem>>, vector<1x16x128xf32>,
    } else {
    }
    %c0_i32_12 = arith.constant 0 : i32
    %10 = arith.cmpi sgt, %arg2, %c0_i32_12 : i32
    %11 = arith.extui %10 : i1 to i32
    %c0_i32_13 = arith.constant 0 : i32
    %12 = arith.cmpi ne, %11, %c0_i32_13 : i32
    scf.if %12 {
      %c0_52 = arith.constant 0 : index
      %c0_53 = arith.constant 0 : index
      %c0_54 = arith.constant 0 : index
      %c0_55 = arith.constant 0 : index
      %90 = vector.load %arg4[%c0_52, %c0_53, %c0_54, %c0_55] : memref<1x1x16x128xf32, #tpu.memory_space<vmem>>, vector<1x1x16x128xf32>
      %91 = vector.shape_cast %90 : vector<1x1x16x128xf32> to vector<1x16x128xf32>
      %c0_56 = arith.constant 0 : index
      %c1_57 = arith.constant 1 : index
      %c0_58 = arith.constant 0 : index
      %92 = vector.load %arg9[%c0_56, %c1_57, %c0_58] : memref<18x18x128xf32, #tpu.memory_space<vmem>>, vector<1x16x128xf32>
      tpu.vector_store %arg9[%c0_56, %c1_57, %c0_58], %91 {strides = array<i32>} : memref<18x18x128xf32, #tpu.memory_space<vmem>>, vector<1x16x128xf32>,
    } else {
    }
    %c0_i32_14 = arith.constant 0 : i32
    %13 = arith.cmpi eq, %arg2, %c0_i32_14 : i32
    %14 = arith.extui %13 : i1 to i32
    %c0_i32_15 = arith.constant 0 : i32
    %15 = arith.cmpi ne, %14, %c0_i32_15 : i32
    scf.if %15 {
      %c17_52 = arith.constant 17 : index
      %c1_53 = arith.constant 1 : index
      %c0_54 = arith.constant 0 : index
      %90 = vector.load %arg9[%c17_52, %c1_53, %c0_54] : memref<18x18x128xf32, #tpu.memory_space<vmem>>, vector<1x16x128xf32>
      tpu.vector_store %arg9[%c17_52, %c1_53, %c0_54], %6 {strides = array<i32>} : memref<18x18x128xf32, #tpu.memory_space<vmem>>, vector<1x16x128xf32>,
    } else {
    }
    %c0_i32_16 = arith.constant 0 : i32
    %16 = arith.cmpi slt, %arg2, %c0_i32_16 : i32
    %17 = arith.extui %16 : i1 to i32
    %c0_i32_17 = arith.constant 0 : i32
    %18 = arith.cmpi ne, %17, %c0_i32_17 : i32
    scf.if %18 {
      %c0_52 = arith.constant 0 : index
      %c0_53 = arith.constant 0 : index
      %c0_54 = arith.constant 0 : index
      %c0_55 = arith.constant 0 : index
      %90 = vector.load %arg5[%c0_52, %c0_53, %c0_54, %c0_55] : memref<1x1x16x128xf32, #tpu.memory_space<vmem>>, vector<1x1x16x128xf32>
      %91 = vector.shape_cast %90 : vector<1x1x16x128xf32> to vector<1x16x128xf32>
      %c17_56 = arith.constant 17 : index
      %c1_57 = arith.constant 1 : index
      %c0_58 = arith.constant 0 : index
      %92 = vector.load %arg9[%c17_56, %c1_57, %c0_58] : memref<18x18x128xf32, #tpu.memory_space<vmem>>, vector<1x16x128xf32>
      tpu.vector_store %arg9[%c17_56, %c1_57, %c0_58], %91 {strides = array<i32>} : memref<18x18x128xf32, #tpu.memory_space<vmem>>, vector<1x16x128xf32>,
    } else {
    }
    %c0_18 = arith.constant 0 : index
    %c0_19 = arith.constant 0 : index
    %19 = vector.load %arg6[%c0_18, %c0_19] : memref<9x128xf32, #tpu.memory_space<vmem>>, vector<9x128xf32>
    %c0_20 = arith.constant 0 : index
    %c0_21 = arith.constant 0 : index
    %20 = vector.load %arg7[%c0_20, %c0_21] : memref<1x128xf32, #tpu.memory_space<vmem>>, vector<1x128xf32>
    %21 = vector.shape_cast %20 : vector<1x128xf32> to vector<1x1x128xf32>
    %22 = vector.shape_cast %21 : vector<1x1x128xf32> to vector<1x1x128xf32>
    %23 = vector.broadcast %22 : vector<1x1x128xf32> to vector<16x16x128xf32>
    %c0_22 = arith.constant 0 : index
    %c0_23 = arith.constant 0 : index
    %c0_24 = arith.constant 0 : index
    %24 = vector.load %arg9[%c0_22, %c0_23, %c0_24] : memref<18x18x128xf32, #tpu.memory_space<vmem>>, vector<16x16x128xf32>
    %25 = vector.extract_strided_slice %19 {offsets = [0, 0], sizes = [1, 128], strides = [1, 1]} : vector<9x128xf32> to vector<1x128xf32>
    %26 = vector.shape_cast %25 : vector<1x128xf32> to vector<128xf32>
    %27 = vector.shape_cast %26 : vector<128xf32> to vector<1x1x128xf32>
    %28 = vector.broadcast %27 : vector<1x1x128xf32> to vector<16x16x128xf32>
    %29 = arith.mulf %24, %28 : vector<16x16x128xf32>
    %30 = arith.addf %23, %29 : vector<16x16x128xf32>
    %c0_25 = arith.constant 0 : index
    %c1_26 = arith.constant 1 : index
    %c0_27 = arith.constant 0 : index
    %31 = vector.load %arg9[%c0_25, %c1_26, %c0_27] : memref<18x18x128xf32, #tpu.memory_space<vmem>>, vector<16x16x128xf32>
    %32 = vector.extract_strided_slice %19 {offsets = [1, 0], sizes = [1, 128], strides = [1, 1]} : vector<9x128xf32> to vector<1x128xf32>
    %33 = vector.shape_cast %32 : vector<1x128xf32> to vector<128xf32>
    %34 = vector.shape_cast %33 : vector<128xf32> to vector<1x1x128xf32>
    %35 = vector.broadcast %34 : vector<1x1x128xf32> to vector<16x16x128xf32>
    %36 = arith.mulf %31, %35 : vector<16x16x128xf32>
    %37 = arith.addf %30, %36 : vector<16x16x128xf32>
    %c0_28 = arith.constant 0 : index
    %c2 = arith.constant 2 : index
    %c0_29 = arith.constant 0 : index
    %38 = vector.load %arg9[%c0_28, %c2, %c0_29] : memref<18x18x128xf32, #tpu.memory_space<vmem>>, vector<16x16x128xf32>
    %39 = vector.extract_strided_slice %19 {offsets = [2, 0], sizes = [1, 128], strides = [1, 1]} : vector<9x128xf32> to vector<1x128xf32>
    %40 = vector.shape_cast %39 : vector<1x128xf32> to vector<128xf32>
    %41 = vector.shape_cast %40 : vector<128xf32> to vector<1x1x128xf32>
    %42 = vector.broadcast %41 : vector<1x1x128xf32> to vector<16x16x128xf32>
    %43 = arith.mulf %38, %42 : vector<16x16x128xf32>
    %44 = arith.addf %37, %43 : vector<16x16x128xf32>
    %c1_30 = arith.constant 1 : index
    %c0_31 = arith.constant 0 : index
    %c0_32 = arith.constant 0 : index
    %45 = vector.load %arg9[%c1_30, %c0_31, %c0_32] : memref<18x18x128xf32, #tpu.memory_space<vmem>>, vector<16x16x128xf32>
    %46 = vector.extract_strided_slice %19 {offsets = [3, 0], sizes = [1, 128], strides = [1, 1]} : vector<9x128xf32> to vector<1x128xf32>
    %47 = vector.shape_cast %46 : vector<1x128xf32> to vector<128xf32>
    %48 = vector.shape_cast %47 : vector<128xf32> to vector<1x1x128xf32>
    %49 = vector.broadcast %48 : vector<1x1x128xf32> to vector<16x16x128xf32>
    %50 = arith.mulf %45, %49 : vector<16x16x128xf32>
    %51 = arith.addf %44, %50 : vector<16x16x128xf32>
    %c1_33 = arith.constant 1 : index
    %c1_34 = arith.constant 1 : index
    %c0_35 = arith.constant 0 : index
    %52 = vector.load %arg9[%c1_33, %c1_34, %c0_35] : memref<18x18x128xf32, #tpu.memory_space<vmem>>, vector<16x16x128xf32>
    %53 = vector.extract_strided_slice %19 {offsets = [4, 0], sizes = [1, 128], strides = [1, 1]} : vector<9x128xf32> to vector<1x128xf32>
    %54 = vector.shape_cast %53 : vector<1x128xf32> to vector<128xf32>
    %55 = vector.shape_cast %54 : vector<128xf32> to vector<1x1x128xf32>
    %56 = vector.broadcast %55 : vector<1x1x128xf32> to vector<16x16x128xf32>
    %57 = arith.mulf %52, %56 : vector<16x16x128xf32>
    %58 = arith.addf %51, %57 : vector<16x16x128xf32>
    %c1_36 = arith.constant 1 : index
    %c2_37 = arith.constant 2 : index
    %c0_38 = arith.constant 0 : index
    %59 = vector.load %arg9[%c1_36, %c2_37, %c0_38] : memref<18x18x128xf32, #tpu.memory_space<vmem>>, vector<16x16x128xf32>
    %60 = vector.extract_strided_slice %19 {offsets = [5, 0], sizes = [1, 128], strides = [1, 1]} : vector<9x128xf32> to vector<1x128xf32>
    %61 = vector.shape_cast %60 : vector<1x128xf32> to vector<128xf32>
    %62 = vector.shape_cast %61 : vector<128xf32> to vector<1x1x128xf32>
    %63 = vector.broadcast %62 : vector<1x1x128xf32> to vector<16x16x128xf32>
    %64 = arith.mulf %59, %63 : vector<16x16x128xf32>
    %65 = arith.addf %58, %64 : vector<16x16x128xf32>
    %c2_39 = arith.constant 2 : index
    %c0_40 = arith.constant 0 : index
    %c0_41 = arith.constant 0 : index
    %66 = vector.load %arg9[%c2_39, %c0_40, %c0_41] : memref<18x18x128xf32, #tpu.memory_space<vmem>>, vector<16x16x128xf32>
    %67 = vector.extract_strided_slice %19 {offsets = [6, 0], sizes = [1, 128], strides = [1, 1]} : vector<9x128xf32> to vector<1x128xf32>
    %68 = vector.shape_cast %67 : vector<1x128xf32> to vector<128xf32>
    %69 = vector.shape_cast %68 : vector<128xf32> to vector<1x1x128xf32>
    %70 = vector.broadcast %69 : vector<1x1x128xf32> to vector<16x16x128xf32>
    %71 = arith.mulf %66, %70 : vector<16x16x128xf32>
    %72 = arith.addf %65, %71 : vector<16x16x128xf32>
    %c2_42 = arith.constant 2 : index
    %c1_43 = arith.constant 1 : index
    %c0_44 = arith.constant 0 : index
    %73 = vector.load %arg9[%c2_42, %c1_43, %c0_44] : memref<18x18x128xf32, #tpu.memory_space<vmem>>, vector<16x16x128xf32>
    %74 = vector.extract_strided_slice %19 {offsets = [7, 0], sizes = [1, 128], strides = [1, 1]} : vector<9x128xf32> to vector<1x128xf32>
    %75 = vector.shape_cast %74 : vector<1x128xf32> to vector<128xf32>
    %76 = vector.shape_cast %75 : vector<128xf32> to vector<1x1x128xf32>
    %77 = vector.broadcast %76 : vector<1x1x128xf32> to vector<16x16x128xf32>
    %78 = arith.mulf %73, %77 : vector<16x16x128xf32>
    %79 = arith.addf %72, %78 : vector<16x16x128xf32>
    %c2_45 = arith.constant 2 : index
    %c2_46 = arith.constant 2 : index
    %c0_47 = arith.constant 0 : index
    %80 = vector.load %arg9[%c2_45, %c2_46, %c0_47] : memref<18x18x128xf32, #tpu.memory_space<vmem>>, vector<16x16x128xf32>
    %81 = vector.extract_strided_slice %19 {offsets = [8, 0], sizes = [1, 128], strides = [1, 1]} : vector<9x128xf32> to vector<1x128xf32>
    %82 = vector.shape_cast %81 : vector<1x128xf32> to vector<128xf32>
    %83 = vector.shape_cast %82 : vector<128xf32> to vector<1x1x128xf32>
    %84 = vector.broadcast %83 : vector<1x1x128xf32> to vector<16x16x128xf32>
    %85 = arith.mulf %80, %84 : vector<16x16x128xf32>
    %86 = arith.addf %79, %85 : vector<16x16x128xf32>
    %c0_48 = arith.constant 0 : index
    %c0_49 = arith.constant 0 : index
    %c0_50 = arith.constant 0 : index
    %c0_51 = arith.constant 0 : index
    %87 = vector.load %arg8[%c0_48, %c0_49, %c0_50, %c0_51] : memref<1x16x16x128xf32, #tpu.memory_space<vmem>>, vector<1x16x16x128xf32>
    %88 = vector.shape_cast %87 : vector<1x16x16x128xf32> to vector<16x16x128xf32>
    %89 = vector.shape_cast %86 : vector<16x16x128xf32> to vector<1x16x16x128xf32>
    tpu.vector_store %arg8[%c0_48, %c0_49, %c0_50, %c0_51], %89 {strides = array<i32>} : memref<1x16x16x128xf32, #tpu.memory_space<vmem>>, vector<1x16x16x128xf32>,
    return
  }
  func.func @transform_0(%arg0: i32, %arg1: i32, %arg2: i32) -> (i32, i32, i32, i32) {
    %c0_i32 = arith.constant 0 : i32
    %c0_i32_0 = arith.constant 0 : i32
    return %arg0, %arg2, %c0_i32, %arg1 : i32, i32, i32, i32
  }
  func.func @transform_1(%arg0: i32, %arg1: i32, %arg2: i32) -> (i32, i32, i32, i32) {
    %c16_i32 = arith.constant 16 : i32
    %0 = arith.muli %arg2, %c16_i32 : i32
    %c1_i32 = arith.constant 1 : i32
    %1 = arith.subi %0, %c1_i32 : i32
    %c0_i32 = arith.constant 0 : i32
    %2 = arith.maxsi %1, %c0_i32 : i32
    %c0_i32_0 = arith.constant 0 : i32
    %c0_i32_1 = arith.constant 0 : i32
    return %arg0, %2, %c0_i32_0, %arg1 : i32, i32, i32, i32
  }
  func.func @transform_2(%arg0: i32, %arg1: i32, %arg2: i32) -> (i32, i32, i32, i32) {
    %c1_i32 = arith.constant 1 : i32
    %0 = arith.addi %arg2, %c1_i32 : i32
    %c16_i32 = arith.constant 16 : i32
    %1 = arith.muli %0, %c16_i32 : i32
    %c15_i32 = arith.constant 15 : i32
    %2 = arith.minsi %1, %c15_i32 : i32
    %c0_i32 = arith.constant 0 : i32
    %c0_i32_0 = arith.constant 0 : i32
    return %arg0, %2, %c0_i32, %arg1 : i32, i32, i32, i32
  }
  func.func @transform_3(%arg0: i32, %arg1: i32, %arg2: i32) -> (i32, i32) {
    %c0_i32 = arith.constant 0 : i32
    %c0_i32_0 = arith.constant 0 : i32
    return %c0_i32, %arg1 : i32, i32
  }
  func.func @transform_4(%arg0: i32, %arg1: i32, %arg2: i32) -> (i32, i32) {
    %c0_i32 = arith.constant 0 : i32
    %c0_i32_0 = arith.constant 0 : i32
    return %c0_i32, %arg1 : i32, i32
  }
  func.func @transform_5(%arg0: i32, %arg1: i32, %arg2: i32) -> (i32, i32, i32, i32) {
    %c0_i32 = arith.constant 0 : i32
    %c0_i32_0 = arith.constant 0 : i32
    return %arg0, %arg2, %c0_i32, %arg1 : i32, i32, i32, i32
  }
}

</mosaic_0001>

<llo_original>
// kernel: tpu_custom_call.1
$region0: #{tpu_custom_call.1}
  #allocation0 [shape = 'u32[]', space=smem, size = 0x4, offset = 0x4, fixed_abs, tag = 'smem constant byte address 0x4 - core index']
  #allocation1 [shape = 'u32[144,128]{1,0:T(1,128)}', space=vmem, size = 0x12000, scoped, tag = 'internal scratch']
  #allocation2 [shape = 'f32[18,18,128]{2,1,0:T(8,128)}', space=vmem, size = 0x36000, scoped, tag = 'scratch operand']
  %s0 = inlined_call_operand.hbm [shape: f32[2,16,16,128], index: 0, kind: input, shape index: {}]
  %s1 = inlined_call_operand.hbm [shape: f32[2,16,16,128], index: 1, kind: input, shape index: {}]
  %s2 = inlined_call_operand.hbm [shape: f32[2,16,16,128], index: 2, kind: input, shape index: {}]
  %s3 = inlined_call_operand.hbm [shape: f32[9,128], index: 3, kind: input, shape index: {}]
  %s4 = inlined_call_operand.vmem [shape: f32[1,128], index: 4, kind: input, shape index: {}]
  %s5 = inlined_call_operand.hbm [shape: f32[2,16,16,128], index: 5, kind: output, shape index: {}]
  %s6 = sld [smem:[#allocation0]]
  $region85: #{tpu_custom_call.1} parent=0
    _
  %s8 = ssub.s32 1, %s6
  %s9 = scalar_select 0, %s8, %s6
  $region1: #{tpu_custom_call.1} parent=0
    #allocation3 [shape = 'u8[262144]{0}', space=vmem, size = 0x40000, scoped, tag = 'input window, operand 0']
    #allocation4 [shape = 's32[2]{0}', space=sflag, size = 0x8, scoped, tag = 'scoped memory for tpu_custom_call.1']
    #allocation5 [shape = 's32[2]{0}', space=sflag, size = 0x8, scoped, tag = 'scoped memory for tpu_custom_call.1']
    #allocation6 [shape = 'u8[16384]{0}', space=vmem, size = 0x4000, scoped, tag = 'input window, operand 1']
    #allocation7 [shape = 's32[2]{0}', space=sflag, size = 0x8, scoped, tag = 'scoped memory for tpu_custom_call.1']
    #allocation8 [shape = 'u8[16384]{0}', space=vmem, size = 0x4000, scoped, tag = 'input window, operand 2']
    #allocation9 [shape = 'u8[8192]{0}', space=vmem, size = 0x2000, scoped, tag = 'input window, operand 3, single buffered']
    #allocation10 [shape = 's32[1]{0}', space=sflag, size = 0x4, scoped, tag = 'scoped memory for tpu_custom_call.1']
    #allocation11 [shape = 'u8[262144]{0}', space=vmem, size = 0x40000, scoped, tag = 'output window, operand 0']
    %10 = vsyncpa [#allocation4], 0
    %s11 = scalar_lea.sflag [#allocation4], 1
    %12 = vsyncpa %s11, 0
    %13 = vsyncpa [#allocation7], 0
    %s14 = scalar_lea.sflag [#allocation7], 1
    %15 = vsyncpa %s14, 0
    %16 = vsyncpa [#allocation10], 0
    %17 = vsyncpa [#allocation5], 0
    %s18 = scalar_lea.sflag [#allocation5], 1
    %19 = vsyncpa %s18, 0
    loop: start=0, step=1, limit=4
    $region2: #{tpu_custom_call.1} parent=1 // loop_pre_header
      _
    $region3: #{tpu_custom_call.1} parent=1 // loop_header
      %s21 = sphi 0, %s25
      %p22 = scmp.ge.s32.totalorder %s21, 4
      %s28 = sphi 0, %s47
      %s29 = sphi 0, %s43
      %s30 = sphi 0, %s39
      %s31 = sphi 0, %s28
      %s32 = sphi 0, %s29
      %s33 = sphi 0, %s30
      %s34 = sphi 0, %s31
      %s35 = sphi 0, %s32
      %s36 = sphi 0, %s33
      %s54 = sphi 0, %s56
      %s57 = sphi 0, %s54
      %s58 = sphi 0, %s57
      %s74 = sphi 0, %s58
      %s92 = sphi 0, %s94
      %s95 = sphi 0, %s92
      %s96 = sphi 0, %s95
      %s112 = sphi 0, %s96
      %s130 = sphi 0, %s132
      %s133 = sphi 0, %s130
      %s134 = sphi 0, %s133
      %s150 = sphi 0, %s134
      %s156 = sphi 0, %s158
      %s159 = sphi 0, %s156
      %s160 = sphi 0, %s159
      %s176 = sphi 0, %s160
      %s182 = sphi 0, %s184
      %s185 = sphi 0, %s182
      %s186 = sphi 0, %s185
      %s202 = sphi 0, %s186
      %s212 = sphi 0, %s214
      %s215 = sphi 0, %s212
      %s216 = sphi 0, %s215
      %s232 = sphi 0, %s216
    $region4: #{tpu_custom_call.1} parent=1 // loop_header_branch
      %24 = sbr.rel (%p22) target = $region8
    $region5: #{tpu_custom_call.1} parent=1 // loop_body
      %s26 = ssub.s32 %s21, 1
      %s27 = ssub.s32 %s21, 2
      %s37 = sadd.s32 1, %s30
      %p38 = scmp.ge.s32.totalorder %s37, 1
      %s39 = scalar_select %p38, 0, %s37
      %s40 = sadd.s32 1, %s29
      %s41 = scalar_select %p38, %s40, %s29
      %p42 = scmp.ge.s32.totalorder %s41, 1
      %s43 = scalar_select %p42, 0, %s41
      %s44 = sadd.s32 1, %s28
      %s45 = scalar_select %p42, %s44, %s28
      %p46 = scmp.ge.s32.totalorder %s45, 2
      %s47 = scalar_select %p46, 0, %s45
      %s48 = ssub.s32 %s28, %s47
      %s49 = ssub.s32 %s30, %s39
      %s50 = sor.u32 %s48, %s49
      %s51 = ssub.s32 %s29, %s43
      %s52 = sor.u32 %s50, %s51
      %p53 = scmp.eq.s32.totalorder %s52, 0
      %s55 = sadd.s32 %s54, 1
      %s56 = scalar_select %p53, %s54, %s55
      %p59 = pneg %p53
      %p60 = scmp.eq.s32.totalorder %s21, 1
      %p61 = por %p59, %p60
      %p62 = scmp.ne.s32.totalorder %s54, %s57
      %p63 = scmp.eq.s32.totalorder %s21, 0
      %p64 = por %p62, %p63
      %p65 = scmp.ne.s32.totalorder %s54, %s57
      %p66 = scmp.eq.s32.totalorder %s26, 1
      %p67 = por %p65, %p66
      %p68 = scmp.ne.s32.totalorder %s57, %s58
      %p69 = scmp.eq.s32.totalorder %s26, 0
      %p70 = por %p68, %p69
      %p71 = scmp.ne.s32.totalorder %s57, %s58
      %p72 = scmp.eq.s32.totalorder %s27, 1
      %p73 = por %p71, %p72
      %p75 = scmp.ne.s32.totalorder %s58, %s74
      %p76 = scmp.eq.s32.totalorder %s27, 0
      %p77 = por %p75, %p76
      %s78 = smul.u32 %s30, 16
      %s79 = ssub.s32 %s78, 1
      %p80 = scmp.gt.s32.totalorder %s79, 0
      %s81 = scalar_select %p80, %s79, 0
      %s82 = smul.u32 %s39, 16
      %s83 = ssub.s32 %s82, 1
      %p84 = scmp.gt.s32.totalorder %s83, 0
      %s85 = scalar_select %p84, %s83, 0
      %s86 = ssub.s32 %s28, %s47
      %s87 = ssub.s32 %s81, %s85
      %s88 = sor.u32 %s86, %s87
      %s89 = ssub.s32 %s29, %s43
      %s90 = sor.u32 %s88, %s89
      %p91 = scmp.eq.s32.totalorder %s90, 0
      %s93 = sadd.s32 %s92, 1
      %s94 = scalar_select %p91, %s92, %s93
      %p97 = pneg %p91
      %p98 = scmp.eq.s32.totalorder %s21, 1
      %p99 = por %p97, %p98
      %p100 = scmp.ne.s32.totalorder %s92, %s95
      %p101 = scmp.eq.s32.totalorder %s21, 0
      %p102 = por %p100, %p101
      %p103 = scmp.ne.s32.totalorder %s92, %s95
      %p104 = scmp.eq.s32.totalorder %s26, 1
      %p105 = por %p103, %p104
      %p106 = scmp.ne.s32.totalorder %s95, %s96
      %p107 = scmp.eq.s32.totalorder %s26, 0
      %p108 = por %p106, %p107
      %p109 = scmp.ne.s32.totalorder %s95, %s96
      %p110 = scmp.eq.s32.totalorder %s27, 1
      %p111 = por %p109, %p110
      %p113 = scmp.ne.s32.totalorder %s96, %s112
      %p114 = scmp.eq.s32.totalorder %s27, 0
      %p115 = por %p113, %p114
      %s116 = sadd.s32 %s30, 1
      %s117 = smul.u32 %s116, 16
      %p118 = scmp.lt.s32.totalorder %s117, 15
      %s119 = scalar_select %p118, %s117, 15
      %s120 = sadd.s32 %s39, 1
      %s121 = smul.u32 %s120, 16
      %p122 = scmp.lt.s32.totalorder %s121, 15
      %s123 = scalar_select %p122, %s121, 15
      %s124 = ssub.s32 %s28, %s47
      %s125 = ssub.s32 %s119, %s123
      %s126 = sor.u32 %s124, %s125
      %s127 = ssub.s32 %s29, %s43
      %s128 = sor.u32 %s126, %s127
      %p129 = scmp.eq.s32.totalorder %s128, 0
      %s131 = sadd.s32 %s130, 1
      %s132 = scalar_select %p129, %s130, %s131
      %p135 = pneg %p129
      %p136 = scmp.eq.s32.totalorder %s21, 1
      %p137 = por %p135, %p136
      %p138 = scmp.ne.s32.totalorder %s130, %s133
      %p139 = scmp.eq.s32.totalorder %s21, 0
      %p140 = por %p138, %p139
      %p141 = scmp.ne.s32.totalorder %s130, %s133
      %p142 = scmp.eq.s32.totalorder %s26, 1
      %p143 = por %p141, %p142
      %p144 = scmp.ne.s32.totalorder %s133, %s134
      %p145 = scmp.eq.s32.totalorder %s26, 0
      %p146 = por %p144, %p145
      %p147 = scmp.ne.s32.totalorder %s133, %s134
      %p148 = scmp.eq.s32.totalorder %s27, 1
      %p149 = por %p147, %p148
      %p151 = scmp.ne.s32.totalorder %s134, %s150
      %p152 = scmp.eq.s32.totalorder %s27, 0
      %p153 = por %p151, %p152
      %s154 = ssub.s32 %s29, %s43
      %p155 = scmp.eq.s32.totalorder %s154, 0
      %s157 = sadd.s32 %s156, 1
      %s158 = scalar_select %p155, %s156, %s157
      %p161 = pneg %p155
      %p162 = scmp.eq.s32.totalorder %s21, 1
      %p163 = por %p161, %p162
      %p164 = scmp.ne.s32.totalorder %s156, %s159
      %p165 = scmp.eq.s32.totalorder %s21, 0
      %p166 = por %p164, %p165
      %p167 = scmp.ne.s32.totalorder %s156, %s159
      %p168 = scmp.eq.s32.totalorder %s26, 1
      %p169 = por %p167, %p168
      %p170 = scmp.ne.s32.totalorder %s159, %s160
      %p171 = scmp.eq.s32.totalorder %s26, 0
      %p172 = por %p170, %p171
      %p173 = scmp.ne.s32.totalorder %s159, %s160
      %p174 = scmp.eq.s32.totalorder %s27, 1
      %p175 = por %p173, %p174
      %p177 = scmp.ne.s32.totalorder %s160, %s176
      %p178 = scmp.eq.s32.totalorder %s27, 0
      %p179 = por %p177, %p178
      %s180 = ssub.s32 %s29, %s43
      %p181 = scmp.eq.s32.totalorder %s180, 0
      %s183 = sadd.s32 %s182, 1
      %s184 = scalar_select %p181, %s182, %s183
      %p187 = pneg %p181
      %p188 = scmp.eq.s32.totalorder %s21, 1
      %p189 = por %p187, %p188
      %p190 = scmp.ne.s32.totalorder %s182, %s185
      %p191 = scmp.eq.s32.totalorder %s21, 0
      %p192 = por %p190, %p191
      %p193 = scmp.ne.s32.totalorder %s182, %s185
      %p194 = scmp.eq.s32.totalorder %s26, 1
      %p195 = por %p193, %p194
      %p196 = scmp.ne.s32.totalorder %s185, %s186
      %p197 = scmp.eq.s32.totalorder %s26, 0
      %p198 = por %p196, %p197
      %p199 = scmp.ne.s32.totalorder %s185, %s186
      %p200 = scmp.eq.s32.totalorder %s27, 1
      %p201 = por %p199, %p200
      %p203 = scmp.ne.s32.totalorder %s186, %s202
      %p204 = scmp.eq.s32.totalorder %s27, 0
      %p205 = por %p203, %p204
      %s206 = ssub.s32 %s28, %s47
      %s207 = ssub.s32 %s30, %s39
      %s208 = sor.u32 %s206, %s207
      %s209 = ssub.s32 %s29, %s43
      %s210 = sor.u32 %s208, %s209
      %p211 = scmp.eq.s32.totalorder %s210, 0
      %s213 = sadd.s32 %s212, 1
      %s214 = scalar_select %p211, %s212, %s213
      %p217 = pneg %p211
      %p218 = scmp.eq.s32.totalorder %s21, 1
      %p219 = por %p217, %p218
      %p220 = scmp.ne.s32.totalorder %s212, %s215
      %p221 = scmp.eq.s32.totalorder %s21, 0
      %p222 = por %p220, %p221
      %p223 = scmp.ne.s32.totalorder %s212, %s215
      %p224 = scmp.eq.s32.totalorder %s26, 1
      %p225 = por %p223, %p224
      %p226 = scmp.ne.s32.totalorder %s215, %s216
      %p227 = scmp.eq.s32.totalorder %s26, 0
      %p228 = por %p226, %p227
      %p229 = scmp.ne.s32.totalorder %s215, %s216
      %p230 = scmp.eq.s32.totalorder %s27, 1
      %p231 = por %p229, %p230
      %p233 = scmp.ne.s32.totalorder %s216, %s232
      %p234 = scmp.eq.s32.totalorder %s27, 0
      %p235 = por %p233, %p234
      %p236 = scmp.le.s32.totalorder 1, %s21
      %p237 = scmp.lt.s32.totalorder %s21, 3
      %p238 = pnand %p236, %p237
      %p239 = pneg %p238
      // Predicated region
      $region9: #{tpu_custom_call.1} parent=5 // pred_check
        _
      $region10: #{tpu_custom_call.1} parent=5 // pred_check_branch
        %241 = sbr.rel (%p238) target = $region12
      $region11: #{tpu_custom_call.1} parent=5 // pred_region
        %s242 = ssub.s32 %s21, 1
        // Predicated region
        $region13: #{tpu_custom_call.1} parent=11 // pred_check
          %p243 = pneg %p172
        $region14: #{tpu_custom_call.1} parent=11 // pred_check_branch
          %245 = sbr.rel (%p243) target = $region16
        $region15: #{tpu_custom_call.1} parent=11 // pred_region
          %s247 = ssub.s32 256, 256
          %248 = vsyncadd [#allocation10], %s247
          %s249 = smul.addr %s32, 128
          %s250 = scalar_lea.hbm %s3, %s249
          %s251 = sshll.u32 [#allocation9], 4
          %s252 = int_to_ptr.vmem [resolvable:$true] %s251
          %257 = dma.hbm_to_vmem [thread:$0]  %s250, 256, %s252, [#allocation10], 128, 128, 8
        $region16: #{tpu_custom_call.1} parent=11 // pred_fallthru
          _
        // Predicated region
        $region17: #{tpu_custom_call.1} parent=11 // pred_check
          %p258 = pneg %p198
        $region18: #{tpu_custom_call.1} parent=11 // pred_check_branch
          %260 = sbr.rel (%p258) target = $region20
        $region19: #{tpu_custom_call.1} parent=11 // pred_region
          %p261 = scmp.lt.s32.totalorder %s32, 0
          %s262 = scalar_select %p261, %s32, 0
          %s263 = scalar_lea.vmem %s4, %s262
        $region20: #{tpu_custom_call.1} parent=11 // pred_fallthru
          _
      $region12: #{tpu_custom_call.1} parent=5 // pred_fallthru
        _
      %p264 = scmp.lt.s32.totalorder %s21, 2
      // Predicated region
      $region21: #{tpu_custom_call.1} parent=5 // pred_check
        %p265 = pneg %p264
      $region22: #{tpu_custom_call.1} parent=5 // pred_check_branch
        %267 = sbr.rel (%p265) target = $region24
      $region23: #{tpu_custom_call.1} parent=5 // pred_region
        // Predicated region
        $region25: #{tpu_custom_call.1} parent=23 // pred_check
          %p268 = pneg %p64
        $region26: #{tpu_custom_call.1} parent=23 // pred_check_branch
          %270 = sbr.rel (%p268) target = $region28
        $region27: #{tpu_custom_call.1} parent=23 // pred_region
          %s271 = sand.u32 %s54, 1
          %s272 = scalar_lea.sflag [#allocation4], %s271
          %s273 = sand.u32 %s54, 1
          %s274 = smul.addr %s273, 256
          %s275 = scalar_lea.vmem [#allocation3], %s274
          %s276 = smul.u32 16, %s30
          %s278 = ssub.s32 4096, 4096
          %279 = vsyncadd %s272, %s278
          %s280 = smul.addr %s276, 2
          %s281 = sadd.s32 %s29, %s280
          %s282 = smul.addr %s28, 32
          %s283 = sadd.s32 %s281, %s282
          %s284 = smul.addr %s283, 128
          %s285 = scalar_lea.hbm %s0, %s284
          %s286 = sshll.u32 %s275, 4
          %s287 = int_to_ptr.vmem [resolvable:$true] %s286
          %292 = dma.hbm_to_vmem [thread:$0]  %s285, 4096, %s287, %s272, 128, 128, 8
        $region28: #{tpu_custom_call.1} parent=23 // pred_fallthru
          _
        // Predicated region
        $region29: #{tpu_custom_call.1} parent=23 // pred_check
          %p293 = pneg %p102
        $region30: #{tpu_custom_call.1} parent=23 // pred_check_branch
          %295 = sbr.rel (%p293) target = $region32
        $region31: #{tpu_custom_call.1} parent=23 // pred_region
          %s296 = sand.u32 %s21, 1
          %s297 = scalar_lea.sflag [#allocation7], %s296
          %s298 = sand.u32 %s92, 1
          %s299 = smul.addr %s298, 16
          %s300 = scalar_lea.vmem [#allocation6], %s299
          %s301 = smul.u32 %s30, 16
          %s302 = ssub.s32 %s301, 1
          %p303 = scmp.gt.s32.totalorder %s302, 0
          %s304 = scalar_select %p303, %s302, 0
          %s306 = ssub.s32 256, 256
          %307 = vsyncadd %s297, %s306
          %s308 = smul.addr %s304, 2
          %s309 = sadd.s32 %s29, %s308
          %s310 = smul.addr %s28, 32
          %s311 = sadd.s32 %s309, %s310
          %s312 = smul.addr %s311, 128
          %s313 = scalar_lea.hbm %s1, %s312
          %s314 = sshll.u32 %s300, 4
          %s315 = int_to_ptr.vmem [resolvable:$true] %s314
          %320 = dma.hbm_to_vmem [thread:$0]  %s313, 256, %s315, %s297, 128, 128, 8
        $region32: #{tpu_custom_call.1} parent=23 // pred_fallthru
          _
        // Predicated region
        $region33: #{tpu_custom_call.1} parent=23 // pred_check
          %p321 = pneg %p140
        $region34: #{tpu_custom_call.1} parent=23 // pred_check_branch
          %323 = sbr.rel (%p321) target = $region36
        $region35: #{tpu_custom_call.1} parent=23 // pred_region
          %s324 = sand.u32 %s21, 1
          %s325 = scalar_lea.sflag [#allocation7], %s324
          %s326 = sand.u32 %s130, 1
          %s327 = smul.addr %s326, 16
          %s328 = scalar_lea.vmem [#allocation8], %s327
          %s329 = sadd.s32 %s30, 1
          %s330 = smul.u32 %s329, 16
          %p331 = scmp.lt.s32.totalorder %s330, 15
          %s332 = scalar_select %p331, %s330, 15
          %s334 = ssub.s32 256, 256
          %335 = vsyncadd %s325, %s334
          %s336 = smul.addr %s332, 2
          %s337 = sadd.s32 %s29, %s336
          %s338 = smul.addr %s28, 32
          %s339 = sadd.s32 %s337, %s338
          %s340 = smul.addr %s339, 128
          %s341 = scalar_lea.hbm %s2, %s340
          %s342 = sshll.u32 %s328, 4
          %s343 = int_to_ptr.vmem [resolvable:$true] %s342
          %348 = dma.hbm_to_vmem [thread:$0]  %s341, 256, %s343, %s325, 128, 128, 8
        $region36: #{tpu_custom_call.1} parent=23 // pred_fallthru
          _
      $region24: #{tpu_custom_call.1} parent=5 // pred_fallthru
        _
      %p349 = scmp.le.s32.totalorder 1, %s21
      %p350 = scmp.lt.s32.totalorder %s21, 3
      %p351 = pnand %p349, %p350
      %p352 = pneg %p351
      // Predicated region
      $region37: #{tpu_custom_call.1} parent=5 // pred_check
        _
      $region38: #{tpu_custom_call.1} parent=5 // pred_check_branch
        %354 = sbr.rel (%p351) target = $region40
      $region39: #{tpu_custom_call.1} parent=5 // pred_region
        %s355 = ssub.s32 %s21, 1
        %s356 = sand.u32 %s57, 1
        %s357 = scalar_lea.sflag [#allocation4], %s356
        %s358 = sand.u32 %s57, 1
        %s359 = smul.addr %s358, 256
        %s360 = scalar_lea.vmem [#allocation3], %s359
        // Predicated region
        $region41: #{tpu_custom_call.1} parent=39 // pred_check
          %p361 = pneg %p70
        $region42: #{tpu_custom_call.1} parent=39 // pred_check_branch
          %363 = sbr.rel (%p361) target = $region44
        $region43: #{tpu_custom_call.1} parent=39 // pred_region
          %364 = dma.done %s357, 4096
        $region44: #{tpu_custom_call.1} parent=39 // pred_fallthru
          _
        %s365 = sand.u32 %s26, 1
        %s366 = scalar_lea.sflag [#allocation7], %s365
        %s367 = sand.u32 %s95, 1
        %s368 = smul.addr %s367, 16
        %s369 = scalar_lea.vmem [#allocation6], %s368
        // Predicated region
        $region45: #{tpu_custom_call.1} parent=39 // pred_check
          %p370 = pneg %p108
        $region46: #{tpu_custom_call.1} parent=39 // pred_check_branch
          %372 = sbr.rel (%p370) target = $region48
        $region47: #{tpu_custom_call.1} parent=39 // pred_region
          %373 = dma.done %s366, 256
        $region48: #{tpu_custom_call.1} parent=39 // pred_fallthru
          _
        %s374 = sand.u32 %s26, 1
        %s375 = scalar_lea.sflag [#allocation7], %s374
        %s376 = sand.u32 %s133, 1
        %s377 = smul.addr %s376, 16
        %s378 = scalar_lea.vmem [#allocation8], %s377
        // Predicated region
        $region49: #{tpu_custom_call.1} parent=39 // pred_check
          %p379 = pneg %p146
        $region50: #{tpu_custom_call.1} parent=39 // pred_check_branch
          %381 = sbr.rel (%p379) target = $region52
        $region51: #{tpu_custom_call.1} parent=39 // pred_region
          %382 = dma.done %s375, 256
        $region52: #{tpu_custom_call.1} parent=39 // pred_fallthru
          _
        // Predicated region
        $region53: #{tpu_custom_call.1} parent=39 // pred_check
          %p383 = pneg %p172
        $region54: #{tpu_custom_call.1} parent=39 // pred_check_branch
          %385 = sbr.rel (%p383) target = $region56
        $region55: #{tpu_custom_call.1} parent=39 // pred_region
          %386 = dma.done [#allocation10], 256
        $region56: #{tpu_custom_call.1} parent=39 // pred_fallthru
          _
        %s387 = sand.u32 %s57, 1
        %s388 = scalar_lea.sflag [#allocation4], %s387
        %s389 = sand.u32 %s57, 1
        %s390 = smul.addr %s389, 256
        %s391 = scalar_lea.vmem [#allocation3], %s390
        %p392 = pneg %p70
        %p393 = pneg %p67
        %s394 = sand.u32 %s26, 1
        %s395 = scalar_lea.sflag [#allocation7], %s394
        %s396 = sand.u32 %s95, 1
        %s397 = smul.addr %s396, 16
        %s398 = scalar_lea.vmem [#allocation6], %s397
        %p399 = pneg %p108
        %p400 = pneg %p105
        %s401 = sand.u32 %s26, 1
        %s402 = scalar_lea.sflag [#allocation7], %s401
        %s403 = sand.u32 %s133, 1
        %s404 = smul.addr %s403, 16
        %s405 = scalar_lea.vmem [#allocation8], %s404
        %p406 = pneg %p146
        %p407 = pneg %p143
        %p408 = pneg %p172
        %p409 = pneg %p169
        %p410 = scmp.lt.s32.totalorder %s32, 0
        %s411 = scalar_select %p410, %s32, 0
        %s412 = scalar_lea.vmem %s4, %s411
        %p413 = pneg %p198
        %p414 = pneg %p195
        %p415 = pneg %p228
        %p416 = pneg %p225
        %s417 = sand.u32 %s215, 1
        %s418 = scalar_lea.sflag [#allocation5], %s417
        %s419 = sand.u32 %s215, 1
        %s420 = smul.addr %s419, 256
        %s421 = scalar_lea.vmem [#allocation11], %s420
        %s422 = smul.u32 16, %s33
        %s423 = smul.u32 %s33, 16
        %s424 = ssub.s32 %s423, 1
        %p425 = scmp.gt.s32.totalorder %s424, 0
        %s426 = scalar_select %p425, %s424, 0
        %s427 = sadd.s32 %s33, 1
        %s428 = smul.u32 %s427, 16
        %p429 = scmp.lt.s32.totalorder %s428, 15
        %s430 = scalar_select %p429, %s428, 15
        %p431 = scmp.lt.s32.totalorder %s32, 0
        %s432 = scalar_select %p431, %s32, 0
        %s433 = scalar_lea.vmem %s4, %s432
        %s434 = smul.u32 16, %s33
        %435 = vst [vmem:[#allocation2] sm:$0x1] 0.0
        %436 = vst [vmem:[#allocation2 + $0x18] sm:$0x1] 0.0
        %437 = vst [vmem:[#allocation2 + $0x30] sm:$0x1] 0.0
        %438 = vst [vmem:[#allocation2 + $0x48] sm:$0x1] 0.0
        %439 = vst [vmem:[#allocation2 + $0x60] sm:$0x1] 0.0
        %440 = vst [vmem:[#allocation2 + $0x78] sm:$0x1] 0.0
        %441 = vst [vmem:[#allocation2 + $0x90] sm:$0x1] 0.0
        %442 = vst [vmem:[#allocation2 + $0xa8] sm:$0x1] 0.0
        %443 = vst [vmem:[#allocation2 + $0xc0] sm:$0x1] 0.0
        %444 = vst [vmem:[#allocation2 + $0xd8] sm:$0x1] 0.0
        %445 = vst [vmem:[#allocation2 + $0xf0] sm:$0x1] 0.0
        %446 = vst [vmem:[#allocation2 + $0x108] sm:$0x1] 0.0
        %447 = vst [vmem:[#allocation2 + $0x120] sm:$0x1] 0.0
        %448 = vst [vmem:[#allocation2 + $0x138] sm:$0x1] 0.0
        %449 = vst [vmem:[#allocation2 + $0x150] sm:$0x1] 0.0
        %450 = vst [vmem:[#allocation2 + $0x168] sm:$0x1] 0.0
        %451 = vst [vmem:[#allocation2 + $0x180] sm:$0x1] 0.0
        %452 = vst [vmem:[#allocation2 + $0x198] sm:$0x1] 0.0
        %453 = vst [vmem:[#allocation2 + $0x11] sm:$0x1] 0.0
        %454 = vst [vmem:[#allocation2 + $0x29] sm:$0x1] 0.0
        %455 = vst [vmem:[#allocation2 + $0x41] sm:$0x1] 0.0
        %456 = vst [vmem:[#allocation2 + $0x59] sm:$0x1] 0.0
        %457 = vst [vmem:[#allocation2 + $0x71] sm:$0x1] 0.0
        %458 = vst [vmem:[#allocation2 + $0x89] sm:$0x1] 0.0
        %459 = vst [vmem:[#allocation2 + $0xa1] sm:$0x1] 0.0
        %460 = vst [vmem:[#allocation2 + $0xb9] sm:$0x1] 0.0
        %461 = vst [vmem:[#allocation2 + $0xd1] sm:$0x1] 0.0
        %462 = vst [vmem:[#allocation2 + $0xe9] sm:$0x1] 0.0
        %463 = vst [vmem:[#allocation2 + $0x101] sm:$0x1] 0.0
        %464 = vst [vmem:[#allocation2 + $0x119] sm:$0x1] 0.0
        %465 = vst [vmem:[#allocation2 + $0x131] sm:$0x1] 0.0
        %466 = vst [vmem:[#allocation2 + $0x149] sm:$0x1] 0.0
        %467 = vst [vmem:[#allocation2 + $0x161] sm:$0x1] 0.0
        %468 = vst [vmem:[#allocation2 + $0x179] sm:$0x1] 0.0
        %469 = vst [vmem:[#allocation2 + $0x191] sm:$0x1] 0.0
        %470 = vst [vmem:[#allocation2 + $0x1a9] sm:$0x1] 0.0
        %v471 = vld [vmem:[%s360] sm:$0xff]
        %v472 = vld [vmem:[%s360 + $0x8] sm:$0xff]
        %v473 = vld [vmem:[%s360 + $0x10] sm:$0xff]
        %v474 = vld [vmem:[%s360 + $0x18] sm:$0xff]
        %v475 = vld [vmem:[%s360 + $0x20] sm:$0xff]
        %v476 = vld [vmem:[%s360 + $0x28] sm:$0xff]
        %v477 = vld [vmem:[%s360 + $0x30] sm:$0xff]
        %v478 = vld [vmem:[%s360 + $0x38] sm:$0xff]
        %v479 = vld [vmem:[%s360 + $0x40] sm:$0xff]
        %v480 = vld [vmem:[%s360 + $0x48] sm:$0xff]
        %v481 = vld [vmem:[%s360 + $0x50] sm:$0xff]
        %v482 = vld [vmem:[%s360 + $0x58] sm:$0xff]
        %v483 = vld [vmem:[%s360 + $0x60] sm:$0xff]
        %v484 = vld [vmem:[%s360 + $0x68] sm:$0xff]
        %v485 = vld [vmem:[%s360 + $0x70] sm:$0xff]
        %v486 = vld [vmem:[%s360 + $0x78] sm:$0xff]
        %v487 = vld [vmem:[%s360 + $0x80] sm:$0xff]
        %v488 = vld [vmem:[%s360 + $0x88] sm:$0xff]
        %v489 = vld [vmem:[%s360 + $0x90] sm:$0xff]
        %v490 = vld [vmem:[%s360 + $0x98] sm:$0xff]
        %v491 = vld [vmem:[%s360 + $0xa0] sm:$0xff]
        %v492 = vld [vmem:[%s360 + $0xa8] sm:$0xff]
        %v493 = vld [vmem:[%s360 + $0xb0] sm:$0xff]
        %v494 = vld [vmem:[%s360 + $0xb8] sm:$0xff]
        %v495 = vld [vmem:[%s360 + $0xc0] sm:$0xff]
        %v496 = vld [vmem:[%s360 + $0xc8] sm:$0xff]
        %v497 = vld [vmem:[%s360 + $0xd0] sm:$0xff]
        %v498 = vld [vmem:[%s360 + $0xd8] sm:$0xff]
        %v499 = vld [vmem:[%s360 + $0xe0] sm:$0xff]
        %v500 = vld [vmem:[%s360 + $0xe8] sm:$0xff]
        %v501 = vld [vmem:[%s360 + $0xf0] sm:$0xff]
        %v502 = vld [vmem:[%s360 + $0xf8] sm:$0xff]
        %s503 = scalar_lea.vmem [#allocation2], 24
        %504 = vst [vmem:[%s503 + $0x1] sm:$0xff] %v471
        %505 = vst [vmem:[%s503 + $0x9] sm:$0xff] %v472
        %506 = vst [vmem:[%s503 + $0x19] sm:$0xff] %v473
        %507 = vst [vmem:[%s503 + $0x21] sm:$0xff] %v474
        %508 = vst [vmem:[%s503 + $0x31] sm:$0xff] %v475
        %509 = vst [vmem:[%s503 + $0x39] sm:$0xff] %v476
        %510 = vst [vmem:[%s503 + $0x49] sm:$0xff] %v477
        %511 = vst [vmem:[%s503 + $0x51] sm:$0xff] %v478
        %512 = vst [vmem:[%s503 + $0x61] sm:$0xff] %v479
        %513 = vst [vmem:[%s503 + $0x69] sm:$0xff] %v480
        %514 = vst [vmem:[%s503 + $0x79] sm:$0xff] %v481
        %515 = vst [vmem:[%s503 + $0x81] sm:$0xff] %v482
        %516 = vst [vmem:[%s503 + $0x91] sm:$0xff] %v483
        %517 = vst [vmem:[%s503 + $0x99] sm:$0xff] %v484
        %518 = vst [vmem:[%s503 + $0xa9] sm:$0xff] %v485
        %519 = vst [vmem:[%s503 + $0xb1] sm:$0xff] %v486
        %520 = vst [vmem:[%s503 + $0xc1] sm:$0xff] %v487
        %521 = vst [vmem:[%s503 + $0xc9] sm:$0xff] %v488
        %522 = vst [vmem:[%s503 + $0xd9] sm:$0xff] %v489
        %523 = vst [vmem:[%s503 + $0xe1] sm:$0xff] %v490
        %524 = vst [vmem:[%s503 + $0xf1] sm:$0xff] %v491
        %525 = vst [vmem:[%s503 + $0xf9] sm:$0xff] %v492
        %526 = vst [vmem:[%s503 + $0x109] sm:$0xff] %v493
        %527 = vst [vmem:[%s503 + $0x111] sm:$0xff] %v494
        %528 = vst [vmem:[%s503 + $0x121] sm:$0xff] %v495
        %529 = vst [vmem:[%s503 + $0x129] sm:$0xff] %v496
        %530 = vst [vmem:[%s503 + $0x139] sm:$0xff] %v497
        %531 = vst [vmem:[%s503 + $0x141] sm:$0xff] %v498
        %532 = vst [vmem:[%s503 + $0x151] sm:$0xff] %v499
        %533 = vst [vmem:[%s503 + $0x159] sm:$0xff] %v500
        %534 = vst [vmem:[%s503 + $0x169] sm:$0xff] %v501
        %535 = vst [vmem:[%s503 + $0x171] sm:$0xff] %v502
        %p536 = scmp.eq.s32.totalorder %s33, 0
        // Predicated region
        $region57: #{tpu_custom_call.1} parent=39 // pred_check
          %p537 = pneg %p536
        $region58: #{tpu_custom_call.1} parent=39 // pred_check_branch
          %539 = sbr.rel (%p537) target = $region60
        $region59: #{tpu_custom_call.1} parent=39 // pred_region
          %540 = vst [vmem:[#allocation2 + $0x1] sm:$0xff] 0.0
          %541 = vst [vmem:[#allocation2 + $0x9] sm:$0xff] 0.0
        $region60: #{tpu_custom_call.1} parent=39 // pred_fallthru
          _
        %p542 = scmp.gt.s32.totalorder %s33, 0
        // Predicated region
        $region61: #{tpu_custom_call.1} parent=39 // pred_check
          %p543 = pneg %p542
        $region62: #{tpu_custom_call.1} parent=39 // pred_check_branch
          %545 = sbr.rel (%p543) target = $region64
        $region63: #{tpu_custom_call.1} parent=39 // pred_region
          %v546 = vld [vmem:[%s369] sm:$0xff]
          %v547 = vld [vmem:[%s369 + $0x8] sm:$0xff]
          %548 = vst [vmem:[#allocation2 + $0x1] sm:$0xff] %v546
          %549 = vst [vmem:[#allocation2 + $0x9] sm:$0xff] %v547
        $region64: #{tpu_custom_call.1} parent=39 // pred_fallthru
          _
        // Predicated region
        $region65: #{tpu_custom_call.1} parent=39 // pred_check
          %p550 = pneg %p536
        $region66: #{tpu_custom_call.1} parent=39 // pred_check_branch
          %552 = sbr.rel (%p550) target = $region68
        $region67: #{tpu_custom_call.1} parent=39 // pred_region
          %s553 = scalar_lea.vmem [#allocation2], 408
          %554 = vst [vmem:[%s553 + $0x1] sm:$0xff] 0.0
          %555 = vst [vmem:[%s553 + $0x9] sm:$0xff] 0.0
        $region68: #{tpu_custom_call.1} parent=39 // pred_fallthru
          _
        %p556 = scmp.lt.s32.totalorder %s33, 0
        // Predicated region
        $region69: #{tpu_custom_call.1} parent=39 // pred_check
          %p557 = pneg %p556
        $region70: #{tpu_custom_call.1} parent=39 // pred_check_branch
          %559 = sbr.rel (%p557) target = $region72
        $region71: #{tpu_custom_call.1} parent=39 // pred_region
          %v560 = vld [vmem:[%s378] sm:$0xff]
          %v561 = vld [vmem:[%s378 + $0x8] sm:$0xff]
          %s562 = scalar_lea.vmem [#allocation2], 408
          %563 = vst [vmem:[%s562 + $0x1] sm:$0xff] %v560
          %564 = vst [vmem:[%s562 + $0x9] sm:$0xff] %v561
        $region72: #{tpu_custom_call.1} parent=39 // pred_fallthru
          _
        %v565 = vld [vmem:[#allocation9] sm:$0xff]
        %v566 = vld [vmem:[#allocation9 + $0x8] sm:$0x1]
        %v567 = vld [vmem:[%s433] sm:$0x1]
        %v569 = vlaneseq
        %v570 = vshrl.u32 %v569, 7
        %v571 = vsub.s32 0, %v570
        %v572 = vrot.slane %v567, %v571
        %v574 = vld [vmem:[#allocation2] sm:$0xff]
        %v575 = vld [vmem:[#allocation2 + $0x8] sm:$0xff]
        %v576 = vld [vmem:[#allocation2 + $0x18] sm:$0xff]
        %v577 = vld [vmem:[#allocation2 + $0x20] sm:$0xff]
        %v578 = vld [vmem:[#allocation2 + $0x30] sm:$0xff]
        %v579 = vld [vmem:[#allocation2 + $0x38] sm:$0xff]
        %v580 = vld [vmem:[#allocation2 + $0x48] sm:$0xff]
        %v581 = vld [vmem:[#allocation2 + $0x50] sm:$0xff]
        %v582 = vld [vmem:[#allocation2 + $0x60] sm:$0xff]
        %v583 = vld [vmem:[#allocation2 + $0x68] sm:$0xff]
        %v584 = vld [vmem:[#allocation2 + $0x78] sm:$0xff]
        %v585 = vld [vmem:[#allocation2 + $0x80] sm:$0xff]
        %v586 = vld [vmem:[#allocation2 + $0x90] sm:$0xff]
        %v587 = vld [vmem:[#allocation2 + $0x98] sm:$0xff]
        %v588 = vld [vmem:[#allocation2 + $0xa8] sm:$0xff]
        %v589 = vld [vmem:[#allocation2 + $0xb0] sm:$0xff]
        %v590 = vld [vmem:[#allocation2 + $0xc0] sm:$0xff]
        %v591 = vld [vmem:[#allocation2 + $0xc8] sm:$0xff]
        %v592 = vld [vmem:[#allocation2 + $0xd8] sm:$0xff]
        %v593 = vld [vmem:[#allocation2 + $0xe0] sm:$0xff]
        %v594 = vld [vmem:[#allocation2 + $0xf0] sm:$0xff]
        %v595 = vld [vmem:[#allocation2 + $0xf8] sm:$0xff]
        %v596 = vld [vmem:[#allocation2 + $0x108] sm:$0xff]
        %v597 = vld [vmem:[#allocation2 + $0x110] sm:$0xff]
        %v598 = vld [vmem:[#allocation2 + $0x120] sm:$0xff]
        %v599 = vld [vmem:[#allocation2 + $0x128] sm:$0xff]
        %v600 = vld [vmem:[#allocation2 + $0x138] sm:$0xff]
        %v601 = vld [vmem:[#allocation2 + $0x140] sm:$0xff]
        %v602 = vld [vmem:[#allocation2 + $0x150] sm:$0xff]
        %v603 = vld [vmem:[#allocation2 + $0x158] sm:$0xff]
        %v604 = vld [vmem:[#allocation2 + $0x168] sm:$0xff]
        %v605 = vld [vmem:[#allocation2 + $0x170] sm:$0xff]
        %v606 = vlaneseq
        %v607 = vshrl.u32 %v606, 7
        %v608 = vsub.s32 0, %v607
        %v609 = vrot.slane %v565, %v608
        %v610 = vmul.f32 %v574, %v609
        %v611 = vmul.f32 %v575, %v609
        %v612 = vmul.f32 %v576, %v609
        %v613 = vmul.f32 %v577, %v609
        %v614 = vmul.f32 %v578, %v609
        %v615 = vmul.f32 %v579, %v609
        %v616 = vmul.f32 %v580, %v609
        %v617 = vmul.f32 %v581, %v609
        %v618 = vmul.f32 %v582, %v609
        %v619 = vmul.f32 %v583, %v609
        %v620 = vmul.f32 %v584, %v609
        %v621 = vmul.f32 %v585, %v609
        %v622 = vmul.f32 %v586, %v609
        %v623 = vmul.f32 %v587, %v609
        %v624 = vmul.f32 %v588, %v609
        %v625 = vmul.f32 %v589, %v609
        %v626 = vmul.f32 %v590, %v609
        %v627 = vmul.f32 %v591, %v609
        %v628 = vmul.f32 %v592, %v609
        %v629 = vmul.f32 %v593, %v609
        %v630 = vmul.f32 %v594, %v609
        %v631 = vmul.f32 %v595, %v609
        %v632 = vmul.f32 %v596, %v609
        %v633 = vmul.f32 %v597, %v609
        %v634 = vmul.f32 %v598, %v609
        %v635 = vmul.f32 %v599, %v609
        %v636 = vmul.f32 %v600, %v609
        %v637 = vmul.f32 %v601, %v609
        %v638 = vmul.f32 %v602, %v609
        %v639 = vmul.f32 %v603, %v609
        %v640 = vmul.f32 %v604, %v609
        %v641 = vmul.f32 %v605, %v609
        %v642 = vadd.f32 %v572, %v610
        %v643 = vadd.f32 %v572, %v611
        %v644 = vadd.f32 %v572, %v612
        %v645 = vadd.f32 %v572, %v613
        %v646 = vadd.f32 %v572, %v614
        %v647 = vadd.f32 %v572, %v615
        %v648 = vadd.f32 %v572, %v616
        %v649 = vadd.f32 %v572, %v617
        %v650 = vadd.f32 %v572, %v618
        %v651 = vadd.f32 %v572, %v619
        %v652 = vadd.f32 %v572, %v620
        %v653 = vadd.f32 %v572, %v621
        %v654 = vadd.f32 %v572, %v622
        %v655 = vadd.f32 %v572, %v623
        %v656 = vadd.f32 %v572, %v624
        %v657 = vadd.f32 %v572, %v625
        %v658 = vadd.f32 %v572, %v626
        %v659 = vadd.f32 %v572, %v627
        %v660 = vadd.f32 %v572, %v628
        %v661 = vadd.f32 %v572, %v629
        %v662 = vadd.f32 %v572, %v630
        %v663 = vadd.f32 %v572, %v631
        %v664 = vadd.f32 %v572, %v632
        %v665 = vadd.f32 %v572, %v633
        %v666 = vadd.f32 %v572, %v634
        %v667 = vadd.f32 %v572, %v635
        %v668 = vadd.f32 %v572, %v636
        %v669 = vadd.f32 %v572, %v637
        %v670 = vadd.f32 %v572, %v638
        %v671 = vadd.f32 %v572, %v639
        %v672 = vadd.f32 %v572, %v640
        %v673 = vadd.f32 %v572, %v641
        %v674 = vld [vmem:[#allocation2 + $0x1] sm:$0xff]
        %v675 = vld [vmem:[#allocation2 + $0x9] sm:$0xff]
        %v676 = vld [vmem:[#allocation2 + $0x19] sm:$0xff]
        %v677 = vld [vmem:[#allocation2 + $0x21] sm:$0xff]
        %v678 = vld [vmem:[#allocation2 + $0x31] sm:$0xff]
        %v679 = vld [vmem:[#allocation2 + $0x39] sm:$0xff]
        %v680 = vld [vmem:[#allocation2 + $0x49] sm:$0xff]
        %v681 = vld [vmem:[#allocation2 + $0x51] sm:$0xff]
        %v682 = vld [vmem:[#allocation2 + $0x61] sm:$0xff]
        %v683 = vld [vmem:[#allocation2 + $0x69] sm:$0xff]
        %v684 = vld [vmem:[#allocation2 + $0x79] sm:$0xff]
        %v685 = vld [vmem:[#allocation2 + $0x81] sm:$0xff]
        %v686 = vld [vmem:[#allocation2 + $0x91] sm:$0xff]
        %v687 = vld [vmem:[#allocation2 + $0x99] sm:$0xff]
        %v688 = vld [vmem:[#allocation2 + $0xa9] sm:$0xff]
        %v689 = vld [vmem:[#allocation2 + $0xb1] sm:$0xff]
        %v690 = vld [vmem:[#allocation2 + $0xc1] sm:$0xff]
        %v691 = vld [vmem:[#allocation2 + $0xc9] sm:$0xff]
        %v692 = vld [vmem:[#allocation2 + $0xd9] sm:$0xff]
        %v693 = vld [vmem:[#allocation2 + $0xe1] sm:$0xff]
        %v694 = vld [vmem:[#allocation2 + $0xf1] sm:$0xff]
        %v695 = vld [vmem:[#allocation2 + $0xf9] sm:$0xff]
        %v696 = vld [vmem:[#allocation2 + $0x109] sm:$0xff]
        %v697 = vld [vmem:[#allocation2 + $0x111] sm:$0xff]
        %v698 = vld [vmem:[#allocation2 + $0x121] sm:$0xff]
        %v699 = vld [vmem:[#allocation2 + $0x129] sm:$0xff]
        %v700 = vld [vmem:[#allocation2 + $0x139] sm:$0xff]
        %v701 = vld [vmem:[#allocation2 + $0x141] sm:$0xff]
        %v702 = vld [vmem:[#allocation2 + $0x151] sm:$0xff]
        %v703 = vld [vmem:[#allocation2 + $0x159] sm:$0xff]
        %v704 = vld [vmem:[#allocation2 + $0x169] sm:$0xff]
        %v705 = vld [vmem:[#allocation2 + $0x171] sm:$0xff]
        %v706 = vlaneseq
        %v707 = vshrl.u32 %v706, 7
        %v708 = vsub.s32 1, %v707
        %v709 = vrot.slane %v565, %v708
        %v710 = vmul.f32 %v674, %v709
        %v711 = vmul.f32 %v675, %v709
        %v712 = vmul.f32 %v676, %v709
        %v713 = vmul.f32 %v677, %v709
        %v714 = vmul.f32 %v678, %v709
        %v715 = vmul.f32 %v679, %v709
        %v716 = vmul.f32 %v680, %v709
        %v717 = vmul.f32 %v681, %v709
        %v718 = vmul.f32 %v682, %v709
        %v719 = vmul.f32 %v683, %v709
        %v720 = vmul.f32 %v684, %v709
        %v721 = vmul.f32 %v685, %v709
        %v722 = vmul.f32 %v686, %v709
        %v723 = vmul.f32 %v687, %v709
        %v724 = vmul.f32 %v688, %v709
        %v725 = vmul.f32 %v689, %v709
        %v726 = vmul.f32 %v690, %v709
        %v727 = vmul.f32 %v691, %v709
        %v728 = vmul.f32 %v692, %v709
        %v729 = vmul.f32 %v693, %v709
        %v730 = vmul.f32 %v694, %v709
        %v731 = vmul.f32 %v695, %v709
        %v732 = vmul.f32 %v696, %v709
        %v733 = vmul.f32 %v697, %v709
        %v734 = vmul.f32 %v698, %v709
        %v735 = vmul.f32 %v699, %v709
        %v736 = vmul.f32 %v700, %v709
        %v737 = vmul.f32 %v701, %v709
        %v738 = vmul.f32 %v702, %v709
        %v739 = vmul.f32 %v703, %v709
        %v740 = vmul.f32 %v704, %v709
        %v741 = vmul.f32 %v705, %v709
        %v742 = vadd.f32 %v642, %v710
        %v743 = vadd.f32 %v643, %v711
        %v744 = vadd.f32 %v644, %v712
        %v745 = vadd.f32 %v645, %v713
        %v746 = vadd.f32 %v646, %v714
        %v747 = vadd.f32 %v647, %v715
        %v748 = vadd.f32 %v648, %v716
        %v749 = vadd.f32 %v649, %v717
        %v750 = vadd.f32 %v650, %v718
        %v751 = vadd.f32 %v651, %v719
        %v752 = vadd.f32 %v652, %v720
        %v753 = vadd.f32 %v653, %v721
        %v754 = vadd.f32 %v654, %v722
        %v755 = vadd.f32 %v655, %v723
        %v756 = vadd.f32 %v656, %v724
        %v757 = vadd.f32 %v657, %v725
        %v758 = vadd.f32 %v658, %v726
        %v759 = vadd.f32 %v659, %v727
        %v760 = vadd.f32 %v660, %v728
        %v761 = vadd.f32 %v661, %v729
        %v762 = vadd.f32 %v662, %v730
        %v763 = vadd.f32 %v663, %v731
        %v764 = vadd.f32 %v664, %v732
        %v765 = vadd.f32 %v665, %v733
        %v766 = vadd.f32 %v666, %v734
        %v767 = vadd.f32 %v667, %v735
        %v768 = vadd.f32 %v668, %v736
        %v769 = vadd.f32 %v669, %v737
        %v770 = vadd.f32 %v670, %v738
        %v771 = vadd.f32 %v671, %v739
        %v772 = vadd.f32 %v672, %v740
        %v773 = vadd.f32 %v673, %v741
        %v774 = vld [vmem:[#allocation2 + $0x2] sm:$0xff]
        %v775 = vld [vmem:[#allocation2 + $0xa] sm:$0xff]
        %v776 = vld [vmem:[#allocation2 + $0x1a] sm:$0xff]
        %v777 = vld [vmem:[#allocation2 + $0x22] sm:$0xff]
        %v778 = vld [vmem:[#allocation2 + $0x32] sm:$0xff]
        %v779 = vld [vmem:[#allocation2 + $0x3a] sm:$0xff]
        %v780 = vld [vmem:[#allocation2 + $0x4a] sm:$0xff]
        %v781 = vld [vmem:[#allocation2 + $0x52] sm:$0xff]
        %v782 = vld [vmem:[#allocation2 + $0x62] sm:$0xff]
        %v783 = vld [vmem:[#allocation2 + $0x6a] sm:$0xff]
        %v784 = vld [vmem:[#allocation2 + $0x7a] sm:$0xff]
        %v785 = vld [vmem:[#allocation2 + $0x82] sm:$0xff]
        %v786 = vld [vmem:[#allocation2 + $0x92] sm:$0xff]
        %v787 = vld [vmem:[#allocation2 + $0x9a] sm:$0xff]
        %v788 = vld [vmem:[#allocation2 + $0xaa] sm:$0xff]
        %v789 = vld [vmem:[#allocation2 + $0xb2] sm:$0xff]
        %v790 = vld [vmem:[#allocation2 + $0xc2] sm:$0xff]
        %v791 = vld [vmem:[#allocation2 + $0xca] sm:$0xff]
        %v792 = vld [vmem:[#allocation2 + $0xda] sm:$0xff]
        %v793 = vld [vmem:[#allocation2 + $0xe2] sm:$0xff]
        %v794 = vld [vmem:[#allocation2 + $0xf2] sm:$0xff]
        %v795 = vld [vmem:[#allocation2 + $0xfa] sm:$0xff]
        %v796 = vld [vmem:[#allocation2 + $0x10a] sm:$0xff]
        %v797 = vld [vmem:[#allocation2 + $0x112] sm:$0xff]
        %v798 = vld [vmem:[#allocation2 + $0x122] sm:$0xff]
        %v799 = vld [vmem:[#allocation2 + $0x12a] sm:$0xff]
        %v800 = vld [vmem:[#allocation2 + $0x13a] sm:$0xff]
        %v801 = vld [vmem:[#allocation2 + $0x142] sm:$0xff]
        %v802 = vld [vmem:[#allocation2 + $0x152] sm:$0xff]
        %v803 = vld [vmem:[#allocation2 + $0x15a] sm:$0xff]
        %v804 = vld [vmem:[#allocation2 + $0x16a] sm:$0xff]
        %v805 = vld [vmem:[#allocation2 + $0x172] sm:$0xff]
        %v806 = vlaneseq
        %v807 = vshrl.u32 %v806, 7
        %v808 = vsub.s32 2, %v807
        %v809 = vrot.slane %v565, %v808
        %v810 = vmul.f32 %v774, %v809
        %v811 = vmul.f32 %v775, %v809
        %v812 = vmul.f32 %v776, %v809
        %v813 = vmul.f32 %v777, %v809
        %v814 = vmul.f32 %v778, %v809
        %v815 = vmul.f32 %v779, %v809
        %v816 = vmul.f32 %v780, %v809
        %v817 = vmul.f32 %v781, %v809
        %v818 = vmul.f32 %v782, %v809
        %v819 = vmul.f32 %v783, %v809
        %v820 = vmul.f32 %v784, %v809
        %v821 = vmul.f32 %v785, %v809
        %v822 = vmul.f32 %v786, %v809
        %v823 = vmul.f32 %v787, %v809
        %v824 = vmul.f32 %v788, %v809
        %v825 = vmul.f32 %v789, %v809
        %v826 = vmul.f32 %v790, %v809
        %v827 = vmul.f32 %v791, %v809
        %v828 = vmul.f32 %v792, %v809
        %v829 = vmul.f32 %v793, %v809
        %v830 = vmul.f32 %v794, %v809
        %v831 = vmul.f32 %v795, %v809
        %v832 = vmul.f32 %v796, %v809
        %v833 = vmul.f32 %v797, %v809
        %v834 = vmul.f32 %v798, %v809
        %v835 = vmul.f32 %v799, %v809
        %v836 = vmul.f32 %v800, %v809
        %v837 = vmul.f32 %v801, %v809
        %v838 = vmul.f32 %v802, %v809
        %v839 = vmul.f32 %v803, %v809
        %v840 = vmul.f32 %v804, %v809
        %v841 = vmul.f32 %v805, %v809
        %v842 = vadd.f32 %v742, %v810
        %v843 = vadd.f32 %v743, %v811
        %v844 = vadd.f32 %v744, %v812
        %v845 = vadd.f32 %v745, %v813
        %v846 = vadd.f32 %v746, %v814
        %v847 = vadd.f32 %v747, %v815
        %v848 = vadd.f32 %v748, %v816
        %v849 = vadd.f32 %v749, %v817
        %v850 = vadd.f32 %v750, %v818
        %v851 = vadd.f32 %v751, %v819
        %v852 = vadd.f32 %v752, %v820
        %v853 = vadd.f32 %v753, %v821
        %v854 = vadd.f32 %v754, %v822
        %v855 = vadd.f32 %v755, %v823
        %v856 = vadd.f32 %v756, %v824
        %v857 = vadd.f32 %v757, %v825
        %v858 = vadd.f32 %v758, %v826
        %v859 = vadd.f32 %v759, %v827
        %v860 = vadd.f32 %v760, %v828
        %v861 = vadd.f32 %v761, %v829
        %v862 = vadd.f32 %v762, %v830
        %v863 = vadd.f32 %v763, %v831
        %v864 = vadd.f32 %v764, %v832
        %v865 = vadd.f32 %v765, %v833
        %v866 = vadd.f32 %v766, %v834
        %v867 = vadd.f32 %v767, %v835
        %v868 = vadd.f32 %v768, %v836
        %v869 = vadd.f32 %v769, %v837
        %v870 = vadd.f32 %v770, %v838
        %v871 = vadd.f32 %v771, %v839
        %v872 = vadd.f32 %v772, %v840
        %v873 = vadd.f32 %v773, %v841
        %v874 = vld [vmem:[%s503] sm:$0xff]
        %v875 = vld [vmem:[%s503 + $0x8] sm:$0xff]
        %v876 = vld [vmem:[%s503 + $0x18] sm:$0xff]
        %v877 = vld [vmem:[%s503 + $0x20] sm:$0xff]
        %v878 = vld [vmem:[%s503 + $0x30] sm:$0xff]
        %v879 = vld [vmem:[%s503 + $0x38] sm:$0xff]
        %v880 = vld [vmem:[%s503 + $0x48] sm:$0xff]
        %v881 = vld [vmem:[%s503 + $0x50] sm:$0xff]
        %v882 = vld [vmem:[%s503 + $0x60] sm:$0xff]
        %v883 = vld [vmem:[%s503 + $0x68] sm:$0xff]
        %v884 = vld [vmem:[%s503 + $0x78] sm:$0xff]
        %v885 = vld [vmem:[%s503 + $0x80] sm:$0xff]
        %v886 = vld [vmem:[%s503 + $0x90] sm:$0xff]
        %v887 = vld [vmem:[%s503 + $0x98] sm:$0xff]
        %v888 = vld [vmem:[%s503 + $0xa8] sm:$0xff]
        %v889 = vld [vmem:[%s503 + $0xb0] sm:$0xff]
        %v890 = vld [vmem:[%s503 + $0xc0] sm:$0xff]
        %v891 = vld [vmem:[%s503 + $0xc8] sm:$0xff]
        %v892 = vld [vmem:[%s503 + $0xd8] sm:$0xff]
        %v893 = vld [vmem:[%s503 + $0xe0] sm:$0xff]
        %v894 = vld [vmem:[%s503 + $0xf0] sm:$0xff]
        %v895 = vld [vmem:[%s503 + $0xf8] sm:$0xff]
        %v896 = vld [vmem:[%s503 + $0x108] sm:$0xff]
        %v897 = vld [vmem:[%s503 + $0x110] sm:$0xff]
        %v898 = vld [vmem:[%s503 + $0x120] sm:$0xff]
        %v899 = vld [vmem:[%s503 + $0x128] sm:$0xff]
        %v900 = vld [vmem:[%s503 + $0x138] sm:$0xff]
        %v901 = vld [vmem:[%s503 + $0x140] sm:$0xff]
        %v902 = vld [vmem:[%s503 + $0x150] sm:$0xff]
        %v903 = vld [vmem:[%s503 + $0x158] sm:$0xff]
        %v904 = vld [vmem:[%s503 + $0x168] sm:$0xff]
        %v905 = vld [vmem:[%s503 + $0x170] sm:$0xff]
        %v906 = vlaneseq
        %v907 = vshrl.u32 %v906, 7
        %v908 = vsub.s32 3, %v907
        %v909 = vrot.slane %v565, %v908
        %v910 = vmul.f32 %v874, %v909
        %v911 = vmul.f32 %v875, %v909
        %v912 = vmul.f32 %v876, %v909
        %v913 = vmul.f32 %v877, %v909
        %v914 = vmul.f32 %v878, %v909
        %v915 = vmul.f32 %v879, %v909
        %v916 = vmul.f32 %v880, %v909
        %v917 = vmul.f32 %v881, %v909
        %v918 = vmul.f32 %v882, %v909
        %v919 = vmul.f32 %v883, %v909
        %v920 = vmul.f32 %v884, %v909
        %v921 = vmul.f32 %v885, %v909
        %v922 = vmul.f32 %v886, %v909
        %v923 = vmul.f32 %v887, %v909
        %v924 = vmul.f32 %v888, %v909
        %v925 = vmul.f32 %v889, %v909
        %v926 = vmul.f32 %v890, %v909
        %v927 = vmul.f32 %v891, %v909
        %v928 = vmul.f32 %v892, %v909
        %v929 = vmul.f32 %v893, %v909
        %v930 = vmul.f32 %v894, %v909
        %v931 = vmul.f32 %v895, %v909
        %v932 = vmul.f32 %v896, %v909
        %v933 = vmul.f32 %v897, %v909
        %v934 = vmul.f32 %v898, %v909
        %v935 = vmul.f32 %v899, %v909
        %v936 = vmul.f32 %v900, %v909
        %v937 = vmul.f32 %v901, %v909
        %v938 = vmul.f32 %v902, %v909
        %v939 = vmul.f32 %v903, %v909
        %v940 = vmul.f32 %v904, %v909
        %v941 = vmul.f32 %v905, %v909
        %v942 = vadd.f32 %v842, %v910
        %v943 = vadd.f32 %v843, %v911
        %v944 = vadd.f32 %v844, %v912
        %v945 = vadd.f32 %v845, %v913
        %v946 = vadd.f32 %v846, %v914
        %v947 = vadd.f32 %v847, %v915
        %v948 = vadd.f32 %v848, %v916
        %v949 = vadd.f32 %v849, %v917
        %v950 = vadd.f32 %v850, %v918
        %v951 = vadd.f32 %v851, %v919
        %v952 = vadd.f32 %v852, %v920
        %v953 = vadd.f32 %v853, %v921
        %v954 = vadd.f32 %v854, %v922
        %v955 = vadd.f32 %v855, %v923
        %v956 = vadd.f32 %v856, %v924
        %v957 = vadd.f32 %v857, %v925
        %v958 = vadd.f32 %v858, %v926
        %v959 = vadd.f32 %v859, %v927
        %v960 = vadd.f32 %v860, %v928
        %v961 = vadd.f32 %v861, %v929
        %v962 = vadd.f32 %v862, %v930
        %v963 = vadd.f32 %v863, %v931
        %v964 = vadd.f32 %v864, %v932
        %v965 = vadd.f32 %v865, %v933
        %v966 = vadd.f32 %v866, %v934
        %v967 = vadd.f32 %v867, %v935
        %v968 = vadd.f32 %v868, %v936
        %v969 = vadd.f32 %v869, %v937
        %v970 = vadd.f32 %v870, %v938
        %v971 = vadd.f32 %v871, %v939
        %v972 = vadd.f32 %v872, %v940
        %v973 = vadd.f32 %v873, %v941
        %v974 = vld [vmem:[%s503 + $0x1] sm:$0xff]
        %v975 = vld [vmem:[%s503 + $0x9] sm:$0xff]
        %v976 = vld [vmem:[%s503 + $0x19] sm:$0xff]
        %v977 = vld [vmem:[%s503 + $0x21] sm:$0xff]
        %v978 = vld [vmem:[%s503 + $0x31] sm:$0xff]
        %v979 = vld [vmem:[%s503 + $0x39] sm:$0xff]
        %v980 = vld [vmem:[%s503 + $0x49] sm:$0xff]
        %v981 = vld [vmem:[%s503 + $0x51] sm:$0xff]
        %v982 = vld [vmem:[%s503 + $0x61] sm:$0xff]
        %v983 = vld [vmem:[%s503 + $0x69] sm:$0xff]
        %v984 = vld [vmem:[%s503 + $0x79] sm:$0xff]
        %v985 = vld [vmem:[%s503 + $0x81] sm:$0xff]
        %v986 = vld [vmem:[%s503 + $0x91] sm:$0xff]
        %v987 = vld [vmem:[%s503 + $0x99] sm:$0xff]
        %v988 = vld [vmem:[%s503 + $0xa9] sm:$0xff]
        %v989 = vld [vmem:[%s503 + $0xb1] sm:$0xff]
        %v990 = vld [vmem:[%s503 + $0xc1] sm:$0xff]
        %v991 = vld [vmem:[%s503 + $0xc9] sm:$0xff]
        %v992 = vld [vmem:[%s503 + $0xd9] sm:$0xff]
        %v993 = vld [vmem:[%s503 + $0xe1] sm:$0xff]
        %v994 = vld [vmem:[%s503 + $0xf1] sm:$0xff]
        %v995 = vld [vmem:[%s503 + $0xf9] sm:$0xff]
        %v996 = vld [vmem:[%s503 + $0x109] sm:$0xff]
        %v997 = vld [vmem:[%s503 + $0x111] sm:$0xff]
        %v998 = vld [vmem:[%s503 + $0x121] sm:$0xff]
        %v999 = vld [vmem:[%s503 + $0x129] sm:$0xff]
        %v1000 = vld [vmem:[%s503 + $0x139] sm:$0xff]
        %v1001 = vld [vmem:[%s503 + $0x141] sm:$0xff]
        %v1002 = vld [vmem:[%s503 + $0x151] sm:$0xff]
        %v1003 = vld [vmem:[%s503 + $0x159] sm:$0xff]
        %v1004 = vld [vmem:[%s503 + $0x169] sm:$0xff]
        %v1005 = vld [vmem:[%s503 + $0x171] sm:$0xff]
        %v1006 = vlaneseq
        %v1007 = vshrl.u32 %v1006, 7
        %v1008 = vsub.s32 4, %v1007
        %v1009 = vrot.slane %v565, %v1008
        %v1010 = vmul.f32 %v974, %v1009
        %v1011 = vmul.f32 %v975, %v1009
        %v1012 = vmul.f32 %v976, %v1009
        %v1013 = vmul.f32 %v977, %v1009
        %v1014 = vmul.f32 %v978, %v1009
        %v1015 = vmul.f32 %v979, %v1009
        %v1016 = vmul.f32 %v980, %v1009
        %v1017 = vmul.f32 %v981, %v1009
        %v1018 = vmul.f32 %v982, %v1009
        %v1019 = vmul.f32 %v983, %v1009
        %v1020 = vmul.f32 %v984, %v1009
        %v1021 = vmul.f32 %v985, %v1009
        %v1022 = vmul.f32 %v986, %v1009
        %v1023 = vmul.f32 %v987, %v1009
        %v1024 = vmul.f32 %v988, %v1009
        %v1025 = vmul.f32 %v989, %v1009
        %v1026 = vmul.f32 %v990, %v1009
        %v1027 = vmul.f32 %v991, %v1009
        %v1028 = vmul.f32 %v992, %v1009
        %v1029 = vmul.f32 %v993, %v1009
        %v1030 = vmul.f32 %v994, %v1009
        %v1031 = vmul.f32 %v995, %v1009
        %v1032 = vmul.f32 %v996, %v1009
        %v1033 = vmul.f32 %v997, %v1009
        %v1034 = vmul.f32 %v998, %v1009
        %v1035 = vmul.f32 %v999, %v1009
        %v1036 = vmul.f32 %v1000, %v1009
        %v1037 = vmul.f32 %v1001, %v1009
        %v1038 = vmul.f32 %v1002, %v1009
        %v1039 = vmul.f32 %v1003, %v1009
        %v1040 = vmul.f32 %v1004, %v1009
        %v1041 = vmul.f32 %v1005, %v1009
        %v1042 = vadd.f32 %v942, %v1010
        %v1043 = vadd.f32 %v943, %v1011
        %v1044 = vadd.f32 %v944, %v1012
        %v1045 = vadd.f32 %v945, %v1013
        %v1046 = vadd.f32 %v946, %v1014
        %v1047 = vadd.f32 %v947, %v1015
        %v1048 = vadd.f32 %v948, %v1016
        %v1049 = vadd.f32 %v949, %v1017
        %v1050 = vadd.f32 %v950, %v1018
        %v1051 = vadd.f32 %v951, %v1019
        %v1052 = vadd.f32 %v952, %v1020
        %v1053 = vadd.f32 %v953, %v1021
        %v1054 = vadd.f32 %v954, %v1022
        %v1055 = vadd.f32 %v955, %v1023
        %v1056 = vadd.f32 %v956, %v1024
        %v1057 = vadd.f32 %v957, %v1025
        %v1058 = vadd.f32 %v958, %v1026
        %v1059 = vadd.f32 %v959, %v1027
        %v1060 = vadd.f32 %v960, %v1028
        %v1061 = vadd.f32 %v961, %v1029
        %v1062 = vadd.f32 %v962, %v1030
        %v1063 = vadd.f32 %v963, %v1031
        %v1064 = vadd.f32 %v964, %v1032
        %v1065 = vadd.f32 %v965, %v1033
        %v1066 = vadd.f32 %v966, %v1034
        %v1067 = vadd.f32 %v967, %v1035
        %v1068 = vadd.f32 %v968, %v1036
        %v1069 = vadd.f32 %v969, %v1037
        %v1070 = vadd.f32 %v970, %v1038
        %v1071 = vadd.f32 %v971, %v1039
        %v1072 = vadd.f32 %v972, %v1040
        %v1073 = vadd.f32 %v973, %v1041
        %v1074 = vld [vmem:[%s503 + $0x2] sm:$0xff]
        %v1075 = vld [vmem:[%s503 + $0xa] sm:$0xff]
        %v1076 = vld [vmem:[%s503 + $0x1a] sm:$0xff]
        %v1077 = vld [vmem:[%s503 + $0x22] sm:$0xff]
        %v1078 = vld [vmem:[%s503 + $0x32] sm:$0xff]
        %v1079 = vld [vmem:[%s503 + $0x3a] sm:$0xff]
        %v1080 = vld [vmem:[%s503 + $0x4a] sm:$0xff]
        %v1081 = vld [vmem:[%s503 + $0x52] sm:$0xff]
        %v1082 = vld [vmem:[%s503 + $0x62] sm:$0xff]
        %v1083 = vld [vmem:[%s503 + $0x6a] sm:$0xff]
        %v1084 = vld [vmem:[%s503 + $0x7a] sm:$0xff]
        %v1085 = vld [vmem:[%s503 + $0x82] sm:$0xff]
        %v1086 = vld [vmem:[%s503 + $0x92] sm:$0xff]
        %v1087 = vld [vmem:[%s503 + $0x9a] sm:$0xff]
        %v1088 = vld [vmem:[%s503 + $0xaa] sm:$0xff]
        %v1089 = vld [vmem:[%s503 + $0xb2] sm:$0xff]
        %v1090 = vld [vmem:[%s503 + $0xc2] sm:$0xff]
        %v1091 = vld [vmem:[%s503 + $0xca] sm:$0xff]
        %v1092 = vld [vmem:[%s503 + $0xda] sm:$0xff]
        %v1093 = vld [vmem:[%s503 + $0xe2] sm:$0xff]
        %v1094 = vld [vmem:[%s503 + $0xf2] sm:$0xff]
        %v1095 = vld [vmem:[%s503 + $0xfa] sm:$0xff]
        %v1096 = vld [vmem:[%s503 + $0x10a] sm:$0xff]
        %v1097 = vld [vmem:[%s503 + $0x112] sm:$0xff]
        %v1098 = vld [vmem:[%s503 + $0x122] sm:$0xff]
        %v1099 = vld [vmem:[%s503 + $0x12a] sm:$0xff]
        %v1100 = vld [vmem:[%s503 + $0x13a] sm:$0xff]
        %v1101 = vld [vmem:[%s503 + $0x142] sm:$0xff]
        %v1102 = vld [vmem:[%s503 + $0x152] sm:$0xff]
        %v1103 = vld [vmem:[%s503 + $0x15a] sm:$0xff]
        %v1104 = vld [vmem:[%s503 + $0x16a] sm:$0xff]
        %v1105 = vld [vmem:[%s503 + $0x172] sm:$0xff]
        %v1106 = vlaneseq
        %v1107 = vshrl.u32 %v1106, 7
        %v1108 = vsub.s32 5, %v1107
        %v1109 = vrot.slane %v565, %v1108
        %v1110 = vmul.f32 %v1074, %v1109
        %v1111 = vmul.f32 %v1075, %v1109
        %v1112 = vmul.f32 %v1076, %v1109
        %v1113 = vmul.f32 %v1077, %v1109
        %v1114 = vmul.f32 %v1078, %v1109
        %v1115 = vmul.f32 %v1079, %v1109
        %v1116 = vmul.f32 %v1080, %v1109
        %v1117 = vmul.f32 %v1081, %v1109
        %v1118 = vmul.f32 %v1082, %v1109
        %v1119 = vmul.f32 %v1083, %v1109
        %v1120 = vmul.f32 %v1084, %v1109
        %v1121 = vmul.f32 %v1085, %v1109
        %v1122 = vmul.f32 %v1086, %v1109
        %v1123 = vmul.f32 %v1087, %v1109
        %v1124 = vmul.f32 %v1088, %v1109
        %v1125 = vmul.f32 %v1089, %v1109
        %v1126 = vmul.f32 %v1090, %v1109
        %v1127 = vmul.f32 %v1091, %v1109
        %v1128 = vmul.f32 %v1092, %v1109
        %v1129 = vmul.f32 %v1093, %v1109
        %v1130 = vmul.f32 %v1094, %v1109
        %v1131 = vmul.f32 %v1095, %v1109
        %v1132 = vmul.f32 %v1096, %v1109
        %v1133 = vmul.f32 %v1097, %v1109
        %v1134 = vmul.f32 %v1098, %v1109
        %v1135 = vmul.f32 %v1099, %v1109
        %v1136 = vmul.f32 %v1100, %v1109
        %v1137 = vmul.f32 %v1101, %v1109
        %v1138 = vmul.f32 %v1102, %v1109
        %v1139 = vmul.f32 %v1103, %v1109
        %v1140 = vmul.f32 %v1104, %v1109
        %v1141 = vmul.f32 %v1105, %v1109
        %v1142 = vadd.f32 %v1042, %v1110
        %v1143 = vadd.f32 %v1043, %v1111
        %v1144 = vadd.f32 %v1044, %v1112
        %v1145 = vadd.f32 %v1045, %v1113
        %v1146 = vadd.f32 %v1046, %v1114
        %v1147 = vadd.f32 %v1047, %v1115
        %v1148 = vadd.f32 %v1048, %v1116
        %v1149 = vadd.f32 %v1049, %v1117
        %v1150 = vadd.f32 %v1050, %v1118
        %v1151 = vadd.f32 %v1051, %v1119
        %v1152 = vadd.f32 %v1052, %v1120
        %v1153 = vadd.f32 %v1053, %v1121
        %v1154 = vadd.f32 %v1054, %v1122
        %v1155 = vadd.f32 %v1055, %v1123
        %v1156 = vadd.f32 %v1056, %v1124
        %v1157 = vadd.f32 %v1057, %v1125
        %v1158 = vadd.f32 %v1058, %v1126
        %v1159 = vadd.f32 %v1059, %v1127
        %v1160 = vadd.f32 %v1060, %v1128
        %v1161 = vadd.f32 %v1061, %v1129
        %v1162 = vadd.f32 %v1062, %v1130
        %v1163 = vadd.f32 %v1063, %v1131
        %v1164 = vadd.f32 %v1064, %v1132
        %v1165 = vadd.f32 %v1065, %v1133
        %v1166 = vadd.f32 %v1066, %v1134
        %v1167 = vadd.f32 %v1067, %v1135
        %v1168 = vadd.f32 %v1068, %v1136
        %v1169 = vadd.f32 %v1069, %v1137
        %v1170 = vadd.f32 %v1070, %v1138
        %v1171 = vadd.f32 %v1071, %v1139
        %v1172 = vadd.f32 %v1072, %v1140
        %v1173 = vadd.f32 %v1073, %v1141
        %s1174 = scalar_lea.vmem [#allocation2], 48
        %v1175 = vld [vmem:[%s1174] sm:$0xff]
        %v1176 = vld [vmem:[%s1174 + $0x8] sm:$0xff]
        %v1177 = vld [vmem:[%s1174 + $0x18] sm:$0xff]
        %v1178 = vld [vmem:[%s1174 + $0x20] sm:$0xff]
        %v1179 = vld [vmem:[%s1174 + $0x30] sm:$0xff]
        %v1180 = vld [vmem:[%s1174 + $0x38] sm:$0xff]
        %v1181 = vld [vmem:[%s1174 + $0x48] sm:$0xff]
        %v1182 = vld [vmem:[%s1174 + $0x50] sm:$0xff]
        %v1183 = vld [vmem:[%s1174 + $0x60] sm:$0xff]
        %v1184 = vld [vmem:[%s1174 + $0x68] sm:$0xff]
        %v1185 = vld [vmem:[%s1174 + $0x78] sm:$0xff]
        %v1186 = vld [vmem:[%s1174 + $0x80] sm:$0xff]
        %v1187 = vld [vmem:[%s1174 + $0x90] sm:$0xff]
        %v1188 = vld [vmem:[%s1174 + $0x98] sm:$0xff]
        %v1189 = vld [vmem:[%s1174 + $0xa8] sm:$0xff]
        %v1190 = vld [vmem:[%s1174 + $0xb0] sm:$0xff]
        %v1191 = vld [vmem:[%s1174 + $0xc0] sm:$0xff]
        %v1192 = vld [vmem:[%s1174 + $0xc8] sm:$0xff]
        %v1193 = vld [vmem:[%s1174 + $0xd8] sm:$0xff]
        %v1194 = vld [vmem:[%s1174 + $0xe0] sm:$0xff]
        %v1195 = vld [vmem:[%s1174 + $0xf0] sm:$0xff]
        %v1196 = vld [vmem:[%s1174 + $0xf8] sm:$0xff]
        %v1197 = vld [vmem:[%s1174 + $0x108] sm:$0xff]
        %v1198 = vld [vmem:[%s1174 + $0x110] sm:$0xff]
        %v1199 = vld [vmem:[%s1174 + $0x120] sm:$0xff]
        %v1200 = vld [vmem:[%s1174 + $0x128] sm:$0xff]
        %v1201 = vld [vmem:[%s1174 + $0x138] sm:$0xff]
        %v1202 = vld [vmem:[%s1174 + $0x140] sm:$0xff]
        %v1203 = vld [vmem:[%s1174 + $0x150] sm:$0xff]
        %v1204 = vld [vmem:[%s1174 + $0x158] sm:$0xff]
        %v1205 = vld [vmem:[%s1174 + $0x168] sm:$0xff]
        %v1206 = vld [vmem:[%s1174 + $0x170] sm:$0xff]
        %v1207 = vlaneseq
        %v1208 = vshrl.u32 %v1207, 7
        %v1209 = vsub.s32 6, %v1208
        %v1210 = vrot.slane %v565, %v1209
        %v1211 = vmul.f32 %v1175, %v1210
        %v1212 = vmul.f32 %v1176, %v1210
        %v1213 = vmul.f32 %v1177, %v1210
        %v1214 = vmul.f32 %v1178, %v1210
        %v1215 = vmul.f32 %v1179, %v1210
        %v1216 = vmul.f32 %v1180, %v1210
        %v1217 = vmul.f32 %v1181, %v1210
        %v1218 = vmul.f32 %v1182, %v1210
        %v1219 = vmul.f32 %v1183, %v1210
        %v1220 = vmul.f32 %v1184, %v1210
        %v1221 = vmul.f32 %v1185, %v1210
        %v1222 = vmul.f32 %v1186, %v1210
        %v1223 = vmul.f32 %v1187, %v1210
        %v1224 = vmul.f32 %v1188, %v1210
        %v1225 = vmul.f32 %v1189, %v1210
        %v1226 = vmul.f32 %v1190, %v1210
        %v1227 = vmul.f32 %v1191, %v1210
        %v1228 = vmul.f32 %v1192, %v1210
        %v1229 = vmul.f32 %v1193, %v1210
        %v1230 = vmul.f32 %v1194, %v1210
        %v1231 = vmul.f32 %v1195, %v1210
        %v1232 = vmul.f32 %v1196, %v1210
        %v1233 = vmul.f32 %v1197, %v1210
        %v1234 = vmul.f32 %v1198, %v1210
        %v1235 = vmul.f32 %v1199, %v1210
        %v1236 = vmul.f32 %v1200, %v1210
        %v1237 = vmul.f32 %v1201, %v1210
        %v1238 = vmul.f32 %v1202, %v1210
        %v1239 = vmul.f32 %v1203, %v1210
        %v1240 = vmul.f32 %v1204, %v1210
        %v1241 = vmul.f32 %v1205, %v1210
        %v1242 = vmul.f32 %v1206, %v1210
        %v1243 = vadd.f32 %v1142, %v1211
        %v1244 = vadd.f32 %v1143, %v1212
        %v1245 = vadd.f32 %v1144, %v1213
        %v1246 = vadd.f32 %v1145, %v1214
        %v1247 = vadd.f32 %v1146, %v1215
        %v1248 = vadd.f32 %v1147, %v1216
        %v1249 = vadd.f32 %v1148, %v1217
        %v1250 = vadd.f32 %v1149, %v1218
        %v1251 = vadd.f32 %v1150, %v1219
        %v1252 = vadd.f32 %v1151, %v1220
        %v1253 = vadd.f32 %v1152, %v1221
        %v1254 = vadd.f32 %v1153, %v1222
        %v1255 = vadd.f32 %v1154, %v1223
        %v1256 = vadd.f32 %v1155, %v1224
        %v1257 = vadd.f32 %v1156, %v1225
        %v1258 = vadd.f32 %v1157, %v1226
        %v1259 = vadd.f32 %v1158, %v1227
        %v1260 = vadd.f32 %v1159, %v1228
        %v1261 = vadd.f32 %v1160, %v1229
        %v1262 = vadd.f32 %v1161, %v1230
        %v1263 = vadd.f32 %v1162, %v1231
        %v1264 = vadd.f32 %v1163, %v1232
        %v1265 = vadd.f32 %v1164, %v1233
        %v1266 = vadd.f32 %v1165, %v1234
        %v1267 = vadd.f32 %v1166, %v1235
        %v1268 = vadd.f32 %v1167, %v1236
        %v1269 = vadd.f32 %v1168, %v1237
        %v1270 = vadd.f32 %v1169, %v1238
        %v1271 = vadd.f32 %v1170, %v1239
        %v1272 = vadd.f32 %v1171, %v1240
        %v1273 = vadd.f32 %v1172, %v1241
        %v1274 = vadd.f32 %v1173, %v1242
        %v1275 = vld [vmem:[%s1174 + $0x1] sm:$0xff]
        %v1276 = vld [vmem:[%s1174 + $0x9] sm:$0xff]
        %v1277 = vld [vmem:[%s1174 + $0x19] sm:$0xff]
        %v1278 = vld [vmem:[%s1174 + $0x21] sm:$0xff]
        %v1279 = vld [vmem:[%s1174 + $0x31] sm:$0xff]
        %v1280 = vld [vmem:[%s1174 + $0x39] sm:$0xff]
        %v1281 = vld [vmem:[%s1174 + $0x49] sm:$0xff]
        %v1282 = vld [vmem:[%s1174 + $0x51] sm:$0xff]
        %v1283 = vld [vmem:[%s1174 + $0x61] sm:$0xff]
        %v1284 = vld [vmem:[%s1174 + $0x69] sm:$0xff]
        %v1285 = vld [vmem:[%s1174 + $0x79] sm:$0xff]
        %v1286 = vld [vmem:[%s1174 + $0x81] sm:$0xff]
        %v1287 = vld [vmem:[%s1174 + $0x91] sm:$0xff]
        %v1288 = vld [vmem:[%s1174 + $0x99] sm:$0xff]
        %v1289 = vld [vmem:[%s1174 + $0xa9] sm:$0xff]
        %v1290 = vld [vmem:[%s1174 + $0xb1] sm:$0xff]
        %v1291 = vld [vmem:[%s1174 + $0xc1] sm:$0xff]
        %v1292 = vld [vmem:[%s1174 + $0xc9] sm:$0xff]
        %v1293 = vld [vmem:[%s1174 + $0xd9] sm:$0xff]
        %v1294 = vld [vmem:[%s1174 + $0xe1] sm:$0xff]
        %v1295 = vld [vmem:[%s1174 + $0xf1] sm:$0xff]
        %v1296 = vld [vmem:[%s1174 + $0xf9] sm:$0xff]
        %v1297 = vld [vmem:[%s1174 + $0x109] sm:$0xff]
        %v1298 = vld [vmem:[%s1174 + $0x111] sm:$0xff]
        %v1299 = vld [vmem:[%s1174 + $0x121] sm:$0xff]
        %v1300 = vld [vmem:[%s1174 + $0x129] sm:$0xff]
        %v1301 = vld [vmem:[%s1174 + $0x139] sm:$0xff]
        %v1302 = vld [vmem:[%s1174 + $0x141] sm:$0xff]
        %v1303 = vld [vmem:[%s1174 + $0x151] sm:$0xff]
        %v1304 = vld [vmem:[%s1174 + $0x159] sm:$0xff]
        %v1305 = vld [vmem:[%s1174 + $0x169] sm:$0xff]
        %v1306 = vld [vmem:[%s1174 + $0x171] sm:$0xff]
        %v1307 = vlaneseq
        %v1308 = vshrl.u32 %v1307, 7
        %v1309 = vsub.s32 7, %v1308
        %v1310 = vrot.slane %v565, %v1309
        %v1311 = vmul.f32 %v1275, %v1310
        %v1312 = vmul.f32 %v1276, %v1310
        %v1313 = vmul.f32 %v1277, %v1310
        %v1314 = vmul.f32 %v1278, %v1310
        %v1315 = vmul.f32 %v1279, %v1310
        %v1316 = vmul.f32 %v1280, %v1310
        %v1317 = vmul.f32 %v1281, %v1310
        %v1318 = vmul.f32 %v1282, %v1310
        %v1319 = vmul.f32 %v1283, %v1310
        %v1320 = vmul.f32 %v1284, %v1310
        %v1321 = vmul.f32 %v1285, %v1310
        %v1322 = vmul.f32 %v1286, %v1310
        %v1323 = vmul.f32 %v1287, %v1310
        %v1324 = vmul.f32 %v1288, %v1310
        %v1325 = vmul.f32 %v1289, %v1310
        %v1326 = vmul.f32 %v1290, %v1310
        %v1327 = vmul.f32 %v1291, %v1310
        %v1328 = vmul.f32 %v1292, %v1310
        %v1329 = vmul.f32 %v1293, %v1310
        %v1330 = vmul.f32 %v1294, %v1310
        %v1331 = vmul.f32 %v1295, %v1310
        %v1332 = vmul.f32 %v1296, %v1310
        %v1333 = vmul.f32 %v1297, %v1310
        %v1334 = vmul.f32 %v1298, %v1310
        %v1335 = vmul.f32 %v1299, %v1310
        %v1336 = vmul.f32 %v1300, %v1310
        %v1337 = vmul.f32 %v1301, %v1310
        %v1338 = vmul.f32 %v1302, %v1310
        %v1339 = vmul.f32 %v1303, %v1310
        %v1340 = vmul.f32 %v1304, %v1310
        %v1341 = vmul.f32 %v1305, %v1310
        %v1342 = vmul.f32 %v1306, %v1310
        %v1343 = vadd.f32 %v1243, %v1311
        %v1344 = vadd.f32 %v1244, %v1312
        %v1345 = vadd.f32 %v1245, %v1313
        %v1346 = vadd.f32 %v1246, %v1314
        %v1347 = vadd.f32 %v1247, %v1315
        %v1348 = vadd.f32 %v1248, %v1316
        %v1349 = vadd.f32 %v1249, %v1317
        %v1350 = vadd.f32 %v1250, %v1318
        %v1351 = vadd.f32 %v1251, %v1319
        %v1352 = vadd.f32 %v1252, %v1320
        %v1353 = vadd.f32 %v1253, %v1321
        %v1354 = vadd.f32 %v1254, %v1322
        %v1355 = vadd.f32 %v1255, %v1323
        %v1356 = vadd.f32 %v1256, %v1324
        %v1357 = vadd.f32 %v1257, %v1325
        %v1358 = vadd.f32 %v1258, %v1326
        %v1359 = vadd.f32 %v1259, %v1327
        %v1360 = vadd.f32 %v1260, %v1328
        %v1361 = vadd.f32 %v1261, %v1329
        %v1362 = vadd.f32 %v1262, %v1330
        %v1363 = vadd.f32 %v1263, %v1331
        %v1364 = vadd.f32 %v1264, %v1332
        %v1365 = vadd.f32 %v1265, %v1333
        %v1366 = vadd.f32 %v1266, %v1334
        %v1367 = vadd.f32 %v1267, %v1335
        %v1368 = vadd.f32 %v1268, %v1336
        %v1369 = vadd.f32 %v1269, %v1337
        %v1370 = vadd.f32 %v1270, %v1338
        %v1371 = vadd.f32 %v1271, %v1339
        %v1372 = vadd.f32 %v1272, %v1340
        %v1373 = vadd.f32 %v1273, %v1341
        %v1374 = vadd.f32 %v1274, %v1342
        %v1375 = vld [vmem:[%s1174 + $0x2] sm:$0xff]
        %v1376 = vld [vmem:[%s1174 + $0xa] sm:$0xff]
        %v1377 = vld [vmem:[%s1174 + $0x1a] sm:$0xff]
        %v1378 = vld [vmem:[%s1174 + $0x22] sm:$0xff]
        %v1379 = vld [vmem:[%s1174 + $0x32] sm:$0xff]
        %v1380 = vld [vmem:[%s1174 + $0x3a] sm:$0xff]
        %v1381 = vld [vmem:[%s1174 + $0x4a] sm:$0xff]
        %v1382 = vld [vmem:[%s1174 + $0x52] sm:$0xff]
        %v1383 = vld [vmem:[%s1174 + $0x62] sm:$0xff]
        %v1384 = vld [vmem:[%s1174 + $0x6a] sm:$0xff]
        %v1385 = vld [vmem:[%s1174 + $0x7a] sm:$0xff]
        %v1386 = vld [vmem:[%s1174 + $0x82] sm:$0xff]
        %v1387 = vld [vmem:[%s1174 + $0x92] sm:$0xff]
        %v1388 = vld [vmem:[%s1174 + $0x9a] sm:$0xff]
        %v1389 = vld [vmem:[%s1174 + $0xaa] sm:$0xff]
        %v1390 = vld [vmem:[%s1174 + $0xb2] sm:$0xff]
        %v1391 = vld [vmem:[%s1174 + $0xc2] sm:$0xff]
        %v1392 = vld [vmem:[%s1174 + $0xca] sm:$0xff]
        %v1393 = vld [vmem:[%s1174 + $0xda] sm:$0xff]
        %v1394 = vld [vmem:[%s1174 + $0xe2] sm:$0xff]
        %v1395 = vld [vmem:[%s1174 + $0xf2] sm:$0xff]
        %v1396 = vld [vmem:[%s1174 + $0xfa] sm:$0xff]
        %v1397 = vld [vmem:[%s1174 + $0x10a] sm:$0xff]
        %v1398 = vld [vmem:[%s1174 + $0x112] sm:$0xff]
        %v1399 = vld [vmem:[%s1174 + $0x122] sm:$0xff]
        %v1400 = vld [vmem:[%s1174 + $0x12a] sm:$0xff]
        %v1401 = vld [vmem:[%s1174 + $0x13a] sm:$0xff]
        %v1402 = vld [vmem:[%s1174 + $0x142] sm:$0xff]
        %v1403 = vld [vmem:[%s1174 + $0x152] sm:$0xff]
        %v1404 = vld [vmem:[%s1174 + $0x15a] sm:$0xff]
        %v1405 = vld [vmem:[%s1174 + $0x16a] sm:$0xff]
        %v1406 = vld [vmem:[%s1174 + $0x172] sm:$0xff]
        %v1407 = vlaneseq
        %v1408 = vshrl.u32 %v1407, 7
        %v1409 = vsub.s32 0, %v1408
        %v1410 = vrot.slane %v566, %v1409
        %v1411 = vmul.f32 %v1375, %v1410
        %v1412 = vmul.f32 %v1376, %v1410
        %v1413 = vmul.f32 %v1377, %v1410
        %v1414 = vmul.f32 %v1378, %v1410
        %v1415 = vmul.f32 %v1379, %v1410
        %v1416 = vmul.f32 %v1380, %v1410
        %v1417 = vmul.f32 %v1381, %v1410
        %v1418 = vmul.f32 %v1382, %v1410
        %v1419 = vmul.f32 %v1383, %v1410
        %v1420 = vmul.f32 %v1384, %v1410
        %v1421 = vmul.f32 %v1385, %v1410
        %v1422 = vmul.f32 %v1386, %v1410
        %v1423 = vmul.f32 %v1387, %v1410
        %v1424 = vmul.f32 %v1388, %v1410
        %v1425 = vmul.f32 %v1389, %v1410
        %v1426 = vmul.f32 %v1390, %v1410
        %v1427 = vmul.f32 %v1391, %v1410
        %v1428 = vmul.f32 %v1392, %v1410
        %v1429 = vmul.f32 %v1393, %v1410
        %v1430 = vmul.f32 %v1394, %v1410
        %v1431 = vmul.f32 %v1395, %v1410
        %v1432 = vmul.f32 %v1396, %v1410
        %v1433 = vmul.f32 %v1397, %v1410
        %v1434 = vmul.f32 %v1398, %v1410
        %v1435 = vmul.f32 %v1399, %v1410
        %v1436 = vmul.f32 %v1400, %v1410
        %v1437 = vmul.f32 %v1401, %v1410
        %v1438 = vmul.f32 %v1402, %v1410
        %v1439 = vmul.f32 %v1403, %v1410
        %v1440 = vmul.f32 %v1404, %v1410
        %v1441 = vmul.f32 %v1405, %v1410
        %v1442 = vmul.f32 %v1406, %v1410
        %v1443 = vadd.f32 %v1343, %v1411
        %v1444 = vadd.f32 %v1344, %v1412
        %v1445 = vadd.f32 %v1345, %v1413
        %v1446 = vadd.f32 %v1346, %v1414
        %v1447 = vadd.f32 %v1347, %v1415
        %v1448 = vadd.f32 %v1348, %v1416
        %v1449 = vadd.f32 %v1349, %v1417
        %v1450 = vadd.f32 %v1350, %v1418
        %v1451 = vadd.f32 %v1351, %v1419
        %v1452 = vadd.f32 %v1352, %v1420
        %v1453 = vadd.f32 %v1353, %v1421
        %v1454 = vadd.f32 %v1354, %v1422
        %v1455 = vadd.f32 %v1355, %v1423
        %v1456 = vadd.f32 %v1356, %v1424
        %v1457 = vadd.f32 %v1357, %v1425
        %v1458 = vadd.f32 %v1358, %v1426
        %v1459 = vadd.f32 %v1359, %v1427
        %v1460 = vadd.f32 %v1360, %v1428
        %v1461 = vadd.f32 %v1361, %v1429
        %v1462 = vadd.f32 %v1362, %v1430
        %v1463 = vadd.f32 %v1363, %v1431
        %v1464 = vadd.f32 %v1364, %v1432
        %v1465 = vadd.f32 %v1365, %v1433
        %v1466 = vadd.f32 %v1366, %v1434
        %v1467 = vadd.f32 %v1367, %v1435
        %v1468 = vadd.f32 %v1368, %v1436
        %v1469 = vadd.f32 %v1369, %v1437
        %v1470 = vadd.f32 %v1370, %v1438
        %v1471 = vadd.f32 %v1371, %v1439
        %v1472 = vadd.f32 %v1372, %v1440
        %v1473 = vadd.f32 %v1373, %v1441
        %v1474 = vadd.f32 %v1374, %v1442
        %1475 = vst [vmem:[%s421] sm:$0xff] %v1443
        %1476 = vst [vmem:[%s421 + $0x8] sm:$0xff] %v1444
        %1477 = vst [vmem:[%s421 + $0x10] sm:$0xff] %v1445
        %1478 = vst [vmem:[%s421 + $0x18] sm:$0xff] %v1446
        %1479 = vst [vmem:[%s421 + $0x20] sm:$0xff] %v1447
        %1480 = vst [vmem:[%s421 + $0x28] sm:$0xff] %v1448
        %1481 = vst [vmem:[%s421 + $0x30] sm:$0xff] %v1449
        %1482 = vst [vmem:[%s421 + $0x38] sm:$0xff] %v1450
        %1483 = vst [vmem:[%s421 + $0x40] sm:$0xff] %v1451
        %1484 = vst [vmem:[%s421 + $0x48] sm:$0xff] %v1452
        %1485 = vst [vmem:[%s421 + $0x50] sm:$0xff] %v1453
        %1486 = vst [vmem:[%s421 + $0x58] sm:$0xff] %v1454
        %1487 = vst [vmem:[%s421 + $0x60] sm:$0xff] %v1455
        %1488 = vst [vmem:[%s421 + $0x68] sm:$0xff] %v1456
        %1489 = vst [vmem:[%s421 + $0x70] sm:$0xff] %v1457
        %1490 = vst [vmem:[%s421 + $0x78] sm:$0xff] %v1458
        %1491 = vst [vmem:[%s421 + $0x80] sm:$0xff] %v1459
        %1492 = vst [vmem:[%s421 + $0x88] sm:$0xff] %v1460
        %1493 = vst [vmem:[%s421 + $0x90] sm:$0xff] %v1461
        %1494 = vst [vmem:[%s421 + $0x98] sm:$0xff] %v1462
        %1495 = vst [vmem:[%s421 + $0xa0] sm:$0xff] %v1463
        %1496 = vst [vmem:[%s421 + $0xa8] sm:$0xff] %v1464
        %1497 = vst [vmem:[%s421 + $0xb0] sm:$0xff] %v1465
        %1498 = vst [vmem:[%s421 + $0xb8] sm:$0xff] %v1466
        %1499 = vst [vmem:[%s421 + $0xc0] sm:$0xff] %v1467
        %1500 = vst [vmem:[%s421 + $0xc8] sm:$0xff] %v1468
        %1501 = vst [vmem:[%s421 + $0xd0] sm:$0xff] %v1469
        %1502 = vst [vmem:[%s421 + $0xd8] sm:$0xff] %v1470
        %1503 = vst [vmem:[%s421 + $0xe0] sm:$0xff] %v1471
        %1504 = vst [vmem:[%s421 + $0xe8] sm:$0xff] %v1472
        %1505 = vst [vmem:[%s421 + $0xf0] sm:$0xff] %v1473
        %1506 = vst [vmem:[%s421 + $0xf8] sm:$0xff] %v1474
        %s1507 = sand.u32 %s215, 1
        %s1508 = scalar_lea.sflag [#allocation5], %s1507
        %s1509 = sand.u32 %s215, 1
        %s1510 = smul.addr %s1509, 256
        %s1511 = scalar_lea.vmem [#allocation11], %s1510
        // Predicated region
        $region73: #{tpu_custom_call.1} parent=39 // pred_check
          %p1512 = pneg %p225
        $region74: #{tpu_custom_call.1} parent=39 // pred_check_branch
          %1514 = sbr.rel (%p1512) target = $region76
        $region75: #{tpu_custom_call.1} parent=39 // pred_region
          %s1515 = smul.u32 16, %s33
          %s1517 = ssub.s32 4096, 4096
          %1518 = vsyncadd %s1508, %s1517
          %s1519 = smul.addr %s1515, 2
          %s1520 = sadd.s32 %s32, %s1519
          %s1521 = smul.addr %s31, 32
          %s1522 = sadd.s32 %s1520, %s1521
          %s1523 = smul.addr %s1522, 128
          %s1524 = scalar_lea.hbm %s5, %s1523
          %s1525 = sshll.u32 %s1511, 4
          %s1526 = int_to_ptr.vmem [resolvable:$true] %s1525
          %1531 = dma.vmem_to_hbm [thread:$0]  %s1526, 4096, %s1524, %s1508, 128, 128, 8
        $region76: #{tpu_custom_call.1} parent=39 // pred_fallthru
          _
      $region40: #{tpu_custom_call.1} parent=5 // pred_fallthru
        _
      %p1532 = scmp.le.s32.totalorder 2, %s21
      // Predicated region
      $region77: #{tpu_custom_call.1} parent=5 // pred_check
        %p1533 = pneg %p1532
      $region78: #{tpu_custom_call.1} parent=5 // pred_check_branch
        %1535 = sbr.rel (%p1533) target = $region80
      $region79: #{tpu_custom_call.1} parent=5 // pred_region
        %s1536 = ssub.s32 %s21, 2
        // Predicated region
        $region81: #{tpu_custom_call.1} parent=79 // pred_check
          %p1537 = pneg %p231
        $region82: #{tpu_custom_call.1} parent=79 // pred_check_branch
          %1539 = sbr.rel (%p1537) target = $region84
        $region83: #{tpu_custom_call.1} parent=79 // pred_region
          %s1540 = sand.u32 %s216, 1
          %s1541 = scalar_lea.sflag [#allocation5], %s1540
          %s1542 = sand.u32 %s216, 1
          %s1543 = smul.addr %s1542, 256
          %s1544 = scalar_lea.vmem [#allocation11], %s1543
          %1545 = dma.done %s1541, 4096
        $region84: #{tpu_custom_call.1} parent=79 // pred_fallthru
          _
      $region80: #{tpu_custom_call.1} parent=5 // pred_fallthru
        _
    $region6: #{tpu_custom_call.1} parent=1 // loop_footer
      %s25 = sadd.s32 1, %s21
    $region7: #{tpu_custom_call.1} parent=1 // loop_footer_branch
      %20 = sbr.rel target = $region3
    $region8: #{tpu_custom_call.1} parent=1 // loop_exit
      _
    %1546 = vsyncpa [#allocation4], 1
    %s1547 = scalar_lea.sflag [#allocation4], 1
    %1548 = vsyncpa %s1547, 1
    %1549 = vsyncpa [#allocation7], 1
    %s1550 = scalar_lea.sflag [#allocation7], 1
    %1551 = vsyncpa %s1550, 1
    %1552 = vsyncpa [#allocation10], 1
    %1553 = vsyncpa [#allocation5], 1
    %s1554 = scalar_lea.sflag [#allocation5], 1
    %1555 = vsyncpa %s1554, 1

</llo_original>
